<compile_context>
chip_gen: v7x
topology: tpu7x:2x2x1
jax: 0.10.0
libtpu: 0.0.40
codegen_flags: <defaults>
</compile_context>

<pallas_src>
import math

import jax
import jax.numpy as jnp
from jax.experimental import pallas as pl
from jax.experimental.pallas import tpu as pltpu


# ----------------------------------------------------------------------------
# Fused kernel: all layers + both directions + final FC, one pallas_call.
# ----------------------------------------------------------------------------
def _make_fused_lstm_kernel(T, B, H, num_dir, num_layers):
    DH = num_dir * H          # width of the carried state (fwd | rev)
    W = 4 * DH                # packed gate width: [i | f | o | g], direction-interleaved
    has_seq = num_layers > 1

    def kernel(*refs):
        idx = 0
        x_ref = refs[idx]; idx += 1                       # (T*B, D) bf16
        wih_refs, whh_refs, b_refs = [], [], []
        for _ in range(num_layers):
            wih_refs.append(refs[idx]); idx += 1          # (in, W)  bf16
            whh_refs.append(refs[idx]); idx += 1          # (DH, W)  bf16 (block structured)
            b_refs.append(refs[idx]);   idx += 1          # (1, W)   f32
        h0_ref = refs[idx]; idx += 1                      # (L, B, DH) f32
        c0_ref = refs[idx]; idx += 1                      # (L, B, DH) f32
        fcw_ref = refs[idx]; idx += 1                     # (DH, Cpad) bf16
        fcb_ref = refs[idx]; idx += 1                     # (1, Cpad)  f32
        out_ref = refs[idx]; idx += 1                     # (B, Cpad)  f32
        seq_ref = refs[idx] if has_seq else None          # (T*B, DH)  f32 scratch

        # ---- hoisted lane masks (built once, constant-foldable) -----------------
        lane_w = jax.lax.broadcasted_iota(jnp.int32, (B, W), 1)
        tanh_mask = lane_w >= 3 * DH                      # g-gate block uses tanh
        if num_dir == 2:
            fwd_mask_w = (lane_w % DH) < H                # fwd lanes within each gate block
            fwd_mask_dh = jax.lax.broadcasted_iota(jnp.int32, (B, DH), 1) < H

        h_first = None
        h_last = None

        for layer in range(num_layers):
            is_last = layer == num_layers - 1

            # ---- prologue: input projection as ONE GEMM over all T*B rows -------
            if layer == 0:
                inp = x_ref[...]                                      # bf16
            else:
                inp = seq_ref[...].astype(jnp.bfloat16)               # (T*B, DH)
            gx = jnp.dot(inp, wih_refs[layer][...],
                         preferred_element_type=jnp.float32) + b_refs[layer][...]

            # Per-step gate rows stay in vregs (no VMEM round trip).  For the
            # bidirectional case each step mixes fwd gates of time i with rev gates
            # of time T-1-i via one hoisted lane-select.
            gx_rows = [gx[t * B:(t + 1) * B, :] for t in range(T)]
            if num_dir == 2:
                gxc = [jnp.where(fwd_mask_w, gx_rows[i], gx_rows[T - 1 - i])
                       for i in range(T)]
            else:
                gxc = gx_rows

            # ---- recurrence: statically unrolled, whh held resident -------------
            whh = whh_refs[layer][...]                                # bf16, hoisted
            h = h0_ref[layer]                                         # (B, DH) f32
            c = c0_ref[layer]                                         # (B, DH) f32

            for i in range(T):
                gh = jnp.dot(h.astype(jnp.bfloat16), whh,
                             preferred_element_type=jnp.float32)      # (B, W)
                g = gxc[i] + gh
                # full-width nonlinearity: sigmoid everywhere, tanh on the g block
                act = jnp.where(tanh_mask, jnp.tanh(g), jax.nn.sigmoid(g))
                i_all = act[:, 0:DH]
                f_all = act[:, DH:2 * DH]
                o_all = act[:, 2 * DH:3 * DH]
                g_all = act[:, 3 * DH:4 * DH]
                c = f_all * c + i_all * g_all                         # f32 cell state
                h = o_all * jnp.tanh(c)                               # (B, DH) = [h_fwd|h_rev]

                if not is_last:
                    if num_dir == 1:
                        seq_ref[i * B:(i + 1) * B, :] = h
                    else:
                        # time-indexed layout for the next layer's prologue GEMM
                        seq_ref[i * B:(i + 1) * B, 0:H] = h[:, 0:H]                 # fwd(t=i)
                        seq_ref[(T - 1 - i) * B:(T - i) * B, H:2 * H] = h[:, H:2 * H]  # rev(t=T-1-i)
                else:
                    # out[:, -1, :] needs fwd state of the last step and rev state of
                    # the first processed step (== time T-1).
                    if i == 0:
                        h_first = h
                    if i == T - 1:
                        h_last = h

        if num_dir == 2:
            last = jnp.where(fwd_mask_dh, h_last, h_first)            # [h_fwd(T-1)|h_rev(T-1)]
        else:
            last = h_last
        out_ref[...] = (jnp.dot(last.astype(jnp.bfloat16), fcw_ref[...],
                                preferred_element_type=jnp.float32) + fcb_ref[...])

    return kernel


# ----------------------------------------------------------------------------
# Weight packing (PyTorch layout -> fused, direction-interleaved layout)
# ----------------------------------------------------------------------------
def _gate_blocks(mat_t, H):
    # columns in torch order [i, f, g, o] -> blocks in target order [i, f, o, g]
    return (mat_t[:, 0:H], mat_t[:, H:2 * H], mat_t[:, 3 * H:4 * H], mat_t[:, 2 * H:3 * H])


def pack_layer(dir_params, H, num_dir):
    DH = num_dir * H
    W = 4 * DH
    wih_b, whh_b, bias_b = [], [], []
    for d in range(num_dir):
        w_ih, w_hh, b_ih, b_hh = dir_params[d]
        wih_b.append(_gate_blocks(jnp.transpose(w_ih), H))            # (in, H) x 4
        whh_b.append(_gate_blocks(jnp.transpose(w_hh), H))            # (H, H) x 4
        bias_b.append(_gate_blocks((b_ih + b_hh).reshape(1, -1), H))  # (1, H) x 4

    # direction-interleaved columns: [i_f i_r | f_f f_r | o_f o_r | g_f g_r]
    wih = jnp.concatenate([wih_b[d][k] for k in range(4) for d in range(num_dir)], axis=-1)
    bias = jnp.concatenate([bias_b[d][k] for k in range(4) for d in range(num_dir)], axis=-1)

    whh = jnp.zeros((DH, W), jnp.float32)                             # block structured
    for d in range(num_dir):
        for k in range(4):
            whh = whh.at[d * H:(d + 1) * H,
                         k * DH + d * H:k * DH + (d + 1) * H].set(whh_b[d][k])

    return (wih.astype(jnp.bfloat16), whh.astype(jnp.bfloat16), bias.astype(jnp.float32))


def init_params(key, embedding_dim, hidden_size, num_classes, num_layers, bidirectional):
    """PyTorch-style uniform init, packed into the fused kernel layout."""
    num_dir = 2 if bidirectional else 1
    H = hidden_size
    k = 1.0 / math.sqrt(H)
    packed = {"lstm": [], "num_classes": num_classes}
    for layer in range(num_layers):
        in_dim = embedding_dim if layer == 0 else H * num_dir
        dir_params = []
        for _ in range(num_dir):
            key, k1, k2, k3, k4 = jax.random.split(key, 5)
            w_ih = jax.random.uniform(k1, (4 * H, in_dim), jnp.float32, -k, k)
            w_hh = jax.random.uniform(k2, (4 * H, H), jnp.float32, -k, k)
            b_ih = jax.random.uniform(k3, (4 * H,), jnp.float32, -k, k)
            b_hh = jax.random.uniform(k4, (4 * H,), jnp.float32, -k, k)
            dir_params.append((w_ih, w_hh, b_ih, b_hh))
        packed["lstm"].append(pack_layer(dir_params, H, num_dir))

    in_fc = H * num_dir
    kf = 1.0 / math.sqrt(in_fc)
    key, k1, k2 = jax.random.split(key, 3)
    fc_w = jax.random.uniform(k1, (in_fc, num_classes), jnp.float32, -kf, kf)
    fc_b = jax.random.uniform(k2, (1, num_classes), jnp.float32, -kf, kf)
    c_pad = max(128, ((num_classes + 127) // 128) * 128)               # lane-dense logits
    packed["fc_w"] = (jnp.zeros((in_fc, c_pad), jnp.float32)
                      .at[:, :num_classes].set(fc_w).astype(jnp.bfloat16))
    packed["fc_b"] = jnp.zeros((1, c_pad), jnp.float32).at[:, :num_classes].set(fc_b)
    return packed, key


# ----------------------------------------------------------------------------
# Forward pass (mirrors LSTM.forward of the PyTorch module)
# ----------------------------------------------------------------------------
def lstm_forward(x, packed, h0, c0, *, hidden_size, num_layers, bidirectional):
    num_dir = 2 if bidirectional else 1
    B, T, D = x.shape
    H = hidden_size
    DH = num_dir * H
    C = packed["num_classes"]
    C_pad = packed["fc_w"].shape[1]

    assert T <= 32, "TODO(synk): switch the static time unroll to lax.fori_loop for large T"

    # Flatten / re-arrange once in XLA; the kernel never reshapes.
    x_flat = jnp.transpose(x, (1, 0, 2)).reshape(T * B, D).astype(jnp.bfloat16)
    h0r = (jnp.transpose(h0.reshape(num_layers, num_dir, B, H), (0, 2, 1, 3))
           .reshape(num_layers, B, DH).astype(jnp.float32))
    c0r = (jnp.transpose(c0.reshape(num_layers, num_dir, B, H), (0, 2, 1, 3))
           .reshape(num_layers, B, DH).astype(jnp.float32))

    kernel = _make_fused_lstm_kernel(T, B, H, num_dir, num_layers)

    args = [x_flat]
    for layer in range(num_layers):
        wih, whh, bias = packed["lstm"][layer]
        args += [wih, whh, bias]
    args += [h0r, c0r, packed["fc_w"], packed["fc_b"]]

    scratch = []
    scratch_bytes = 0
    if num_layers > 1:
        scratch.append(pltpu.VMEM((T * B, DH), jnp.float32))           # inter-layer activations
        scratch_bytes = T * B * DH * 4

    # Size the scoped VMEM arena to the actual footprint (with margin), not a flat 32 MiB.
    arg_bytes = sum(int(a.size) * jnp.dtype(a.dtype).itemsize for a in args)
    out_bytes = B * C_pad * 4
    vmem_limit = int(min(64 * 1024 * 1024,
                         max(4 * 1024 * 1024, 4 * (arg_bytes + scratch_bytes + out_bytes))))

    vmem = pl.BlockSpec(memory_space=pltpu.MemorySpace.VMEM)
    logits = pl.pallas_call(
        kernel,
        out_shape=jax.ShapeDtypeStruct((B, C_pad), jnp.float32),
        in_specs=[vmem] * len(args),
        out_specs=vmem,
        scratch_shapes=scratch,
        compiler_params=pltpu.CompilerParams(vmem_limit_bytes=vmem_limit),
    )(*args)

    logits = logits[:, :C]                                              # drop lane padding
    # torch's .squeeze(0): only drops the batch dim when it is size 1.
    if logits.shape[0] == 1:
        logits = jnp.squeeze(logits, axis=0)
    return logits


# ----------------------------------------------------------------------------
if __name__ == "__main__":
    batch = 2
    seq = 8
    embedding_dim = 16
    hidden_size = 32
    num_classes = 8
    num_layers = 2
    bidirectional = True
    num_dir = 2 if bidirectional else 1

    key = jax.random.PRNGKey(0)
    packed, key = init_params(key, embedding_dim, hidden_size, num_classes,
                              num_layers, bidirectional)

    key, kx, kh, kc = jax.random.split(key, 4)
    x = jax.random.normal(kx, (batch, seq, embedding_dim), jnp.float32)
    # The PyTorch forward draws fresh random h0/c0 each call; drawn deterministically here.
    h0 = jax.random.normal(kh, (num_layers * num_dir, batch, hidden_size), jnp.float32)
    c0 = jax.random.normal(kc, (num_layers * num_dir, batch, hidden_size), jnp.float32)

    out = lstm_forward(x, packed, h0, c0, hidden_size=hidden_size,
                       num_layers=num_layers, bidirectional=bidirectional)
    out = jax.block_until_ready(out)
    assert out.shape == (batch, num_classes), out.shape
    assert bool(jnp.all(jnp.isfinite(out)))
    print("KERNEL_OK")
</pallas_src>

<mosaic_0001>
module attributes {stable_mosaic.version = 11 : i64} {
  func.func @kernel(%arg0: memref<16x16xbf16, #tpu.memory_space<vmem>>, %arg1: memref<16x256xbf16, #tpu.memory_space<vmem>>, %arg2: memref<64x256xbf16, #tpu.memory_space<vmem>>, %arg3: memref<1x256xf32, #tpu.memory_space<vmem>>, %arg4: memref<64x256xbf16, #tpu.memory_space<vmem>>, %arg5: memref<64x256xbf16, #tpu.memory_space<vmem>>, %arg6: memref<1x256xf32, #tpu.memory_space<vmem>>, %arg7: memref<2x2x64xf32, #tpu.memory_space<vmem>>, %arg8: memref<2x2x64xf32, #tpu.memory_space<vmem>>, %arg9: memref<64x128xbf16, #tpu.memory_space<vmem>>, %arg10: memref<1x128xf32, #tpu.memory_space<vmem>>, %arg11: memref<2x128xf32, #tpu.memory_space<vmem>>, %arg12: memref<16x64xf32, #tpu.memory_space<vmem>>) attributes {dimension_semantics = [], scalar_prefetch = 0 : i64, scratch_operands = 1 : i64, tpu.core_type = #tpu.core_type<tc>} {
    %0 = tpu.iota {dimensions = array<i32: 1>} : vector<2x256xi32>
    %c192_i32 = arith.constant 192 : i32
    %1 = vector.broadcast %c192_i32 : i32 to vector<2x256xi32>
    %2 = arith.cmpi sge, %0, %1 : vector<2x256xi32>
    %c64_i32 = arith.constant 64 : i32
    %c0_i32 = arith.constant 0 : i32
    %3 = arith.cmpi eq, %c64_i32, %c0_i32 : i32
    %c1_i32 = arith.constant 1 : i32
    %4 = arith.select %3, %c1_i32, %c64_i32 : i32
    %5 = vector.broadcast %4 : i32 to vector<2x256xi32>
    %6 = arith.remsi %0, %5 : vector<2x256xi32>
    %c0_i32_0 = arith.constant 0 : i32
    %7 = vector.broadcast %c0_i32_0 : i32 to vector<2x256xi32>
    %8 = arith.cmpi ne, %6, %7 : vector<2x256xi32>
    %c0_i32_1 = arith.constant 0 : i32
    %9 = vector.broadcast %c0_i32_1 : i32 to vector<2x256xi32>
    %10 = arith.cmpi slt, %6, %9 : vector<2x256xi32>
    %c0_i32_2 = arith.constant 0 : i32
    %11 = arith.cmpi slt, %4, %c0_i32_2 : i32
    %12 = vector.broadcast %11 : i1 to vector<2x256xi1>
    %13 = vector.broadcast %12 : vector<2x256xi1> to vector<2x256xi1>
    %14 = arith.xori %10, %13 : vector<2x256xi1>
    %15 = arith.andi %14, %8 : vector<2x256xi1>
    %16 = vector.broadcast %4 : i32 to vector<2x256xi32>
    %17 = arith.addi %6, %16 : vector<2x256xi32>
    %18 = arith.select %15, %17, %6 : vector<2x256xi1>, vector<2x256xi32>
    %c32_i32 = arith.constant 32 : i32
    %19 = vector.broadcast %c32_i32 : i32 to vector<2x256xi32>
    %20 = arith.cmpi slt, %18, %19 : vector<2x256xi32>
    %21 = tpu.iota {dimensions = array<i32: 1>} : vector<2x64xi32>
    %c32_i32_3 = arith.constant 32 : i32
    %22 = vector.broadcast %c32_i32_3 : i32 to vector<2x64xi32>
    %23 = arith.cmpi slt, %21, %22 : vector<2x64xi32>
    %c0 = arith.constant 0 : index
    %c0_4 = arith.constant 0 : index
    %24 = vector.load %arg0[%c0, %c0_4] : memref<16x16xbf16, #tpu.memory_space<vmem>>, vector<16x16xbf16>
    %c0_5 = arith.constant 0 : index
    %c0_6 = arith.constant 0 : index
    %25 = vector.load %arg1[%c0_5, %c0_6] : memref<16x256xbf16, #tpu.memory_space<vmem>>, vector<16x256xbf16>
    %cst = arith.constant dense<0.000000e+00> : vector<16x256xf32>
    %26 = tpu.matmul %24, %25, %cst {dimension_numbers = #tpu.dot_dimension_numbers<[1], [0], [0], [1], [0, 0, 1, 1], [], []>} : vector<16x16xbf16>, vector<16x256xbf16>, vector<16x256xf32> -> vector<16x256xf32>
    %c0_7 = arith.constant 0 : index
    %c0_8 = arith.constant 0 : index
    %27 = vector.load %arg3[%c0_7, %c0_8] : memref<1x256xf32, #tpu.memory_space<vmem>>, vector<1x256xf32>
    %28 = vector.broadcast %27 : vector<1x256xf32> to vector<16x256xf32>
    %29 = arith.addf %26, %28 : vector<16x256xf32>
    %30 = vector.extract_strided_slice %29 {offsets = [0, 0], sizes = [2, 256], strides = [1, 1]} : vector<16x256xf32> to vector<2x256xf32>
    %31 = vector.extract_strided_slice %29 {offsets = [2, 0], sizes = [2, 256], strides = [1, 1]} : vector<16x256xf32> to vector<2x256xf32>
    %32 = vector.extract_strided_slice %29 {offsets = [4, 0], sizes = [2, 256], strides = [1, 1]} : vector<16x256xf32> to vector<2x256xf32>
    %33 = vector.extract_strided_slice %29 {offsets = [6, 0], sizes = [2, 256], strides = [1, 1]} : vector<16x256xf32> to vector<2x256xf32>
    %34 = vector.extract_strided_slice %29 {offsets = [8, 0], sizes = [2, 256], strides = [1, 1]} : vector<16x256xf32> to vector<2x256xf32>
    %35 = vector.extract_strided_slice %29 {offsets = [10, 0], sizes = [2, 256], strides = [1, 1]} : vector<16x256xf32> to vector<2x256xf32>
    %36 = vector.extract_strided_slice %29 {offsets = [12, 0], sizes = [2, 256], strides = [1, 1]} : vector<16x256xf32> to vector<2x256xf32>
    %37 = vector.extract_strided_slice %29 {offsets = [14, 0], sizes = [2, 256], strides = [1, 1]} : vector<16x256xf32> to vector<2x256xf32>
    %38 = arith.select %20, %30, %37 : vector<2x256xi1>, vector<2x256xf32>
    %39 = arith.select %20, %31, %36 : vector<2x256xi1>, vector<2x256xf32>
    %40 = arith.select %20, %32, %35 : vector<2x256xi1>, vector<2x256xf32>
    %41 = arith.select %20, %33, %34 : vector<2x256xi1>, vector<2x256xf32>
    %42 = arith.select %20, %34, %33 : vector<2x256xi1>, vector<2x256xf32>
    %43 = arith.select %20, %35, %32 : vector<2x256xi1>, vector<2x256xf32>
    %44 = arith.select %20, %36, %31 : vector<2x256xi1>, vector<2x256xf32>
    %45 = arith.select %20, %37, %30 : vector<2x256xi1>, vector<2x256xf32>
    %c0_9 = arith.constant 0 : index
    %c0_10 = arith.constant 0 : index
    %46 = vector.load %arg2[%c0_9, %c0_10] : memref<64x256xbf16, #tpu.memory_space<vmem>>, vector<64x256xbf16>
    %c0_11 = arith.constant 0 : index
    %c0_12 = arith.constant 0 : index
    %c0_13 = arith.constant 0 : index
    %47 = vector.load %arg7[%c0_11, %c0_12, %c0_13] : memref<2x2x64xf32, #tpu.memory_space<vmem>>, vector<1x2x64xf32>
    %48 = vector.shape_cast %47 : vector<1x2x64xf32> to vector<2x64xf32>
    %c0_14 = arith.constant 0 : index
    %c0_15 = arith.constant 0 : index
    %c0_16 = arith.constant 0 : index
    %49 = vector.load %arg8[%c0_14, %c0_15, %c0_16] : memref<2x2x64xf32, #tpu.memory_space<vmem>>, vector<1x2x64xf32>
    %50 = vector.shape_cast %49 : vector<1x2x64xf32> to vector<2x64xf32>
    %51 = arith.truncf %48 : vector<2x64xf32> to vector<2x64xbf16>
    %cst_17 = arith.constant dense<0.000000e+00> : vector<2x256xf32>
    %52 = tpu.matmul %51, %46, %cst_17 {dimension_numbers = #tpu.dot_dimension_numbers<[1], [0], [0], [1], [0, 0, 1, 1], [], []>} : vector<2x64xbf16>, vector<64x256xbf16>, vector<2x256xf32> -> vector<2x256xf32>
    %53 = arith.addf %38, %52 : vector<2x256xf32>
    %54 = math.tanh %53 : vector<2x256xf32>
    %55 = arith.negf %53 : vector<2x256xf32>
    %56 = math.exp %55 : vector<2x256xf32>
    %cst_18 = arith.constant 1.000000e+00 : f32
    %57 = vector.broadcast %cst_18 : f32 to vector<2x256xf32>
    %58 = arith.addf %57, %56 : vector<2x256xf32>
    %59 = arith.divf %57, %58 : vector<2x256xf32>
    %60 = arith.select %2, %54, %59 : vector<2x256xi1>, vector<2x256xf32>
    %61 = vector.extract_strided_slice %60 {offsets = [0, 0], sizes = [2, 64], strides = [1, 1]} : vector<2x256xf32> to vector<2x64xf32>
    %62 = vector.extract_strided_slice %60 {offsets = [0, 64], sizes = [2, 64], strides = [1, 1]} : vector<2x256xf32> to vector<2x64xf32>
    %63 = vector.extract_strided_slice %60 {offsets = [0, 128], sizes = [2, 64], strides = [1, 1]} : vector<2x256xf32> to vector<2x64xf32>
    %64 = vector.extract_strided_slice %60 {offsets = [0, 192], sizes = [2, 64], strides = [1, 1]} : vector<2x256xf32> to vector<2x64xf32>
    %65 = arith.mulf %62, %50 : vector<2x64xf32>
    %66 = arith.mulf %61, %64 : vector<2x64xf32>
    %67 = arith.addf %65, %66 : vector<2x64xf32>
    %68 = math.tanh %67 : vector<2x64xf32>
    %69 = arith.mulf %63, %68 : vector<2x64xf32>
    %70 = vector.extract_strided_slice %69 {offsets = [0, 0], sizes = [2, 32], strides = [1, 1]} : vector<2x64xf32> to vector<2x32xf32>
    %c0_19 = arith.constant 0 : index
    %c0_20 = arith.constant 0 : index
    %71 = vector.load %arg12[%c0_19, %c0_20] : memref<16x64xf32, #tpu.memory_space<vmem>>, vector<2x32xf32>
    tpu.vector_store %arg12[%c0_19, %c0_20], %70 {strides = array<i32>} : memref<16x64xf32, #tpu.memory_space<vmem>>, vector<2x32xf32>,
    %72 = vector.extract_strided_slice %69 {offsets = [0, 32], sizes = [2, 32], strides = [1, 1]} : vector<2x64xf32> to vector<2x32xf32>
    %c14 = arith.constant 14 : index
    %c32 = arith.constant 32 : index
    %73 = vector.load %arg12[%c14, %c32] : memref<16x64xf32, #tpu.memory_space<vmem>>, vector<2x32xf32>
    tpu.vector_store %arg12[%c14, %c32], %72 {strides = array<i32>} : memref<16x64xf32, #tpu.memory_space<vmem>>, vector<2x32xf32>,
    %74 = arith.truncf %69 : vector<2x64xf32> to vector<2x64xbf16>
    %cst_21 = arith.constant dense<0.000000e+00> : vector<2x256xf32>
    %75 = tpu.matmul %74, %46, %cst_21 {dimension_numbers = #tpu.dot_dimension_numbers<[1], [0], [0], [1], [0, 0, 1, 1], [], []>} : vector<2x64xbf16>, vector<64x256xbf16>, vector<2x256xf32> -> vector<2x256xf32>
    %76 = arith.addf %39, %75 : vector<2x256xf32>
    %77 = math.tanh %76 : vector<2x256xf32>
    %78 = arith.negf %76 : vector<2x256xf32>
    %79 = math.exp %78 : vector<2x256xf32>
    %cst_22 = arith.constant 1.000000e+00 : f32
    %80 = vector.broadcast %cst_22 : f32 to vector<2x256xf32>
    %81 = arith.addf %80, %79 : vector<2x256xf32>
    %82 = arith.divf %80, %81 : vector<2x256xf32>
    %83 = arith.select %2, %77, %82 : vector<2x256xi1>, vector<2x256xf32>
    %84 = vector.extract_strided_slice %83 {offsets = [0, 0], sizes = [2, 64], strides = [1, 1]} : vector<2x256xf32> to vector<2x64xf32>
    %85 = vector.extract_strided_slice %83 {offsets = [0, 64], sizes = [2, 64], strides = [1, 1]} : vector<2x256xf32> to vector<2x64xf32>
    %86 = vector.extract_strided_slice %83 {offsets = [0, 128], sizes = [2, 64], strides = [1, 1]} : vector<2x256xf32> to vector<2x64xf32>
    %87 = vector.extract_strided_slice %83 {offsets = [0, 192], sizes = [2, 64], strides = [1, 1]} : vector<2x256xf32> to vector<2x64xf32>
    %88 = arith.mulf %85, %67 : vector<2x64xf32>
    %89 = arith.mulf %84, %87 : vector<2x64xf32>
    %90 = arith.addf %88, %89 : vector<2x64xf32>
    %91 = math.tanh %90 : vector<2x64xf32>
    %92 = arith.mulf %86, %91 : vector<2x64xf32>
    %93 = vector.extract_strided_slice %92 {offsets = [0, 0], sizes = [2, 32], strides = [1, 1]} : vector<2x64xf32> to vector<2x32xf32>
    %c2 = arith.constant 2 : index
    %c0_23 = arith.constant 0 : index
    %94 = vector.load %arg12[%c2, %c0_23] : memref<16x64xf32, #tpu.memory_space<vmem>>, vector<2x32xf32>
    tpu.vector_store %arg12[%c2, %c0_23], %93 {strides = array<i32>} : memref<16x64xf32, #tpu.memory_space<vmem>>, vector<2x32xf32>,
    %95 = vector.extract_strided_slice %92 {offsets = [0, 32], sizes = [2, 32], strides = [1, 1]} : vector<2x64xf32> to vector<2x32xf32>
    %c12 = arith.constant 12 : index
    %c32_24 = arith.constant 32 : index
    %96 = vector.load %arg12[%c12, %c32_24] : memref<16x64xf32, #tpu.memory_space<vmem>>, vector<2x32xf32>
    tpu.vector_store %arg12[%c12, %c32_24], %95 {strides = array<i32>} : memref<16x64xf32, #tpu.memory_space<vmem>>, vector<2x32xf32>,
    %97 = arith.truncf %92 : vector<2x64xf32> to vector<2x64xbf16>
    %cst_25 = arith.constant dense<0.000000e+00> : vector<2x256xf32>
    %98 = tpu.matmul %97, %46, %cst_25 {dimension_numbers = #tpu.dot_dimension_numbers<[1], [0], [0], [1], [0, 0, 1, 1], [], []>} : vector<2x64xbf16>, vector<64x256xbf16>, vector<2x256xf32> -> vector<2x256xf32>
    %99 = arith.addf %40, %98 : vector<2x256xf32>
    %100 = math.tanh %99 : vector<2x256xf32>
    %101 = arith.negf %99 : vector<2x256xf32>
    %102 = math.exp %101 : vector<2x256xf32>
    %cst_26 = arith.constant 1.000000e+00 : f32
    %103 = vector.broadcast %cst_26 : f32 to vector<2x256xf32>
    %104 = arith.addf %103, %102 : vector<2x256xf32>
    %105 = arith.divf %103, %104 : vector<2x256xf32>
    %106 = arith.select %2, %100, %105 : vector<2x256xi1>, vector<2x256xf32>
    %107 = vector.extract_strided_slice %106 {offsets = [0, 0], sizes = [2, 64], strides = [1, 1]} : vector<2x256xf32> to vector<2x64xf32>
    %108 = vector.extract_strided_slice %106 {offsets = [0, 64], sizes = [2, 64], strides = [1, 1]} : vector<2x256xf32> to vector<2x64xf32>
    %109 = vector.extract_strided_slice %106 {offsets = [0, 128], sizes = [2, 64], strides = [1, 1]} : vector<2x256xf32> to vector<2x64xf32>
    %110 = vector.extract_strided_slice %106 {offsets = [0, 192], sizes = [2, 64], strides = [1, 1]} : vector<2x256xf32> to vector<2x64xf32>
    %111 = arith.mulf %108, %90 : vector<2x64xf32>
    %112 = arith.mulf %107, %110 : vector<2x64xf32>
    %113 = arith.addf %111, %112 : vector<2x64xf32>
    %114 = math.tanh %113 : vector<2x64xf32>
    %115 = arith.mulf %109, %114 : vector<2x64xf32>
    %116 = vector.extract_strided_slice %115 {offsets = [0, 0], sizes = [2, 32], strides = [1, 1]} : vector<2x64xf32> to vector<2x32xf32>
    %c4 = arith.constant 4 : index
    %c0_27 = arith.constant 0 : index
    %117 = vector.load %arg12[%c4, %c0_27] : memref<16x64xf32, #tpu.memory_space<vmem>>, vector<2x32xf32>
    tpu.vector_store %arg12[%c4, %c0_27], %116 {strides = array<i32>} : memref<16x64xf32, #tpu.memory_space<vmem>>, vector<2x32xf32>,
    %118 = vector.extract_strided_slice %115 {offsets = [0, 32], sizes = [2, 32], strides = [1, 1]} : vector<2x64xf32> to vector<2x32xf32>
    %c10 = arith.constant 10 : index
    %c32_28 = arith.constant 32 : index
    %119 = vector.load %arg12[%c10, %c32_28] : memref<16x64xf32, #tpu.memory_space<vmem>>, vector<2x32xf32>
    tpu.vector_store %arg12[%c10, %c32_28], %118 {strides = array<i32>} : memref<16x64xf32, #tpu.memory_space<vmem>>, vector<2x32xf32>,
    %120 = arith.truncf %115 : vector<2x64xf32> to vector<2x64xbf16>
    %cst_29 = arith.constant dense<0.000000e+00> : vector<2x256xf32>
    %121 = tpu.matmul %120, %46, %cst_29 {dimension_numbers = #tpu.dot_dimension_numbers<[1], [0], [0], [1], [0, 0, 1, 1], [], []>} : vector<2x64xbf16>, vector<64x256xbf16>, vector<2x256xf32> -> vector<2x256xf32>
    %122 = arith.addf %41, %121 : vector<2x256xf32>
    %123 = math.tanh %122 : vector<2x256xf32>
    %124 = arith.negf %122 : vector<2x256xf32>
    %125 = math.exp %124 : vector<2x256xf32>
    %cst_30 = arith.constant 1.000000e+00 : f32
    %126 = vector.broadcast %cst_30 : f32 to vector<2x256xf32>
    %127 = arith.addf %126, %125 : vector<2x256xf32>
    %128 = arith.divf %126, %127 : vector<2x256xf32>
    %129 = arith.select %2, %123, %128 : vector<2x256xi1>, vector<2x256xf32>
    %130 = vector.extract_strided_slice %129 {offsets = [0, 0], sizes = [2, 64], strides = [1, 1]} : vector<2x256xf32> to vector<2x64xf32>
    %131 = vector.extract_strided_slice %129 {offsets = [0, 64], sizes = [2, 64], strides = [1, 1]} : vector<2x256xf32> to vector<2x64xf32>
    %132 = vector.extract_strided_slice %129 {offsets = [0, 128], sizes = [2, 64], strides = [1, 1]} : vector<2x256xf32> to vector<2x64xf32>
    %133 = vector.extract_strided_slice %129 {offsets = [0, 192], sizes = [2, 64], strides = [1, 1]} : vector<2x256xf32> to vector<2x64xf32>
    %134 = arith.mulf %131, %113 : vector<2x64xf32>
    %135 = arith.mulf %130, %133 : vector<2x64xf32>
    %136 = arith.addf %134, %135 : vector<2x64xf32>
    %137 = math.tanh %136 : vector<2x64xf32>
    %138 = arith.mulf %132, %137 : vector<2x64xf32>
    %139 = vector.extract_strided_slice %138 {offsets = [0, 0], sizes = [2, 32], strides = [1, 1]} : vector<2x64xf32> to vector<2x32xf32>
    %c6 = arith.constant 6 : index
    %c0_31 = arith.constant 0 : index
    %140 = vector.load %arg12[%c6, %c0_31] : memref<16x64xf32, #tpu.memory_space<vmem>>, vector<2x32xf32>
    tpu.vector_store %arg12[%c6, %c0_31], %139 {strides = array<i32>} : memref<16x64xf32, #tpu.memory_space<vmem>>, vector<2x32xf32>,
    %141 = vector.extract_strided_slice %138 {offsets = [0, 32], sizes = [2, 32], strides = [1, 1]} : vector<2x64xf32> to vector<2x32xf32>
    %c8 = arith.constant 8 : index
    %c32_32 = arith.constant 32 : index
    %142 = vector.load %arg12[%c8, %c32_32] : memref<16x64xf32, #tpu.memory_space<vmem>>, vector<2x32xf32>
    tpu.vector_store %arg12[%c8, %c32_32], %141 {strides = array<i32>} : memref<16x64xf32, #tpu.memory_space<vmem>>, vector<2x32xf32>,
    %143 = arith.truncf %138 : vector<2x64xf32> to vector<2x64xbf16>
    %cst_33 = arith.constant dense<0.000000e+00> : vector<2x256xf32>
    %144 = tpu.matmul %143, %46, %cst_33 {dimension_numbers = #tpu.dot_dimension_numbers<[1], [0], [0], [1], [0, 0, 1, 1], [], []>} : vector<2x64xbf16>, vector<64x256xbf16>, vector<2x256xf32> -> vector<2x256xf32>
    %145 = arith.addf %42, %144 : vector<2x256xf32>
    %146 = math.tanh %145 : vector<2x256xf32>
    %147 = arith.negf %145 : vector<2x256xf32>
    %148 = math.exp %147 : vector<2x256xf32>
    %cst_34 = arith.constant 1.000000e+00 : f32
    %149 = vector.broadcast %cst_34 : f32 to vector<2x256xf32>
    %150 = arith.addf %149, %148 : vector<2x256xf32>
    %151 = arith.divf %149, %150 : vector<2x256xf32>
    %152 = arith.select %2, %146, %151 : vector<2x256xi1>, vector<2x256xf32>
    %153 = vector.extract_strided_slice %152 {offsets = [0, 0], sizes = [2, 64], strides = [1, 1]} : vector<2x256xf32> to vector<2x64xf32>
    %154 = vector.extract_strided_slice %152 {offsets = [0, 64], sizes = [2, 64], strides = [1, 1]} : vector<2x256xf32> to vector<2x64xf32>
    %155 = vector.extract_strided_slice %152 {offsets = [0, 128], sizes = [2, 64], strides = [1, 1]} : vector<2x256xf32> to vector<2x64xf32>
    %156 = vector.extract_strided_slice %152 {offsets = [0, 192], sizes = [2, 64], strides = [1, 1]} : vector<2x256xf32> to vector<2x64xf32>
    %157 = arith.mulf %154, %136 : vector<2x64xf32>
    %158 = arith.mulf %153, %156 : vector<2x64xf32>
    %159 = arith.addf %157, %158 : vector<2x64xf32>
    %160 = math.tanh %159 : vector<2x64xf32>
    %161 = arith.mulf %155, %160 : vector<2x64xf32>
    %162 = vector.extract_strided_slice %161 {offsets = [0, 0], sizes = [2, 32], strides = [1, 1]} : vector<2x64xf32> to vector<2x32xf32>
    %c8_35 = arith.constant 8 : index
    %c0_36 = arith.constant 0 : index
    %163 = vector.load %arg12[%c8_35, %c0_36] : memref<16x64xf32, #tpu.memory_space<vmem>>, vector<2x32xf32>
    tpu.vector_store %arg12[%c8_35, %c0_36], %162 {strides = array<i32>} : memref<16x64xf32, #tpu.memory_space<vmem>>, vector<2x32xf32>,
    %164 = vector.extract_strided_slice %161 {offsets = [0, 32], sizes = [2, 32], strides = [1, 1]} : vector<2x64xf32> to vector<2x32xf32>
    %c6_37 = arith.constant 6 : index
    %c32_38 = arith.constant 32 : index
    %165 = vector.load %arg12[%c6_37, %c32_38] : memref<16x64xf32, #tpu.memory_space<vmem>>, vector<2x32xf32>
    tpu.vector_store %arg12[%c6_37, %c32_38], %164 {strides = array<i32>} : memref<16x64xf32, #tpu.memory_space<vmem>>, vector<2x32xf32>,
    %166 = arith.truncf %161 : vector<2x64xf32> to vector<2x64xbf16>
    %cst_39 = arith.constant dense<0.000000e+00> : vector<2x256xf32>
    %167 = tpu.matmul %166, %46, %cst_39 {dimension_numbers = #tpu.dot_dimension_numbers<[1], [0], [0], [1], [0, 0, 1, 1], [], []>} : vector<2x64xbf16>, vector<64x256xbf16>, vector<2x256xf32> -> vector<2x256xf32>
    %168 = arith.addf %43, %167 : vector<2x256xf32>
    %169 = math.tanh %168 : vector<2x256xf32>
    %170 = arith.negf %168 : vector<2x256xf32>
    %171 = math.exp %170 : vector<2x256xf32>
    %cst_40 = arith.constant 1.000000e+00 : f32
    %172 = vector.broadcast %cst_40 : f32 to vector<2x256xf32>
    %173 = arith.addf %172, %171 : vector<2x256xf32>
    %174 = arith.divf %172, %173 : vector<2x256xf32>
    %175 = arith.select %2, %169, %174 : vector<2x256xi1>, vector<2x256xf32>
    %176 = vector.extract_strided_slice %175 {offsets = [0, 0], sizes = [2, 64], strides = [1, 1]} : vector<2x256xf32> to vector<2x64xf32>
    %177 = vector.extract_strided_slice %175 {offsets = [0, 64], sizes = [2, 64], strides = [1, 1]} : vector<2x256xf32> to vector<2x64xf32>
    %178 = vector.extract_strided_slice %175 {offsets = [0, 128], sizes = [2, 64], strides = [1, 1]} : vector<2x256xf32> to vector<2x64xf32>
    %179 = vector.extract_strided_slice %175 {offsets = [0, 192], sizes = [2, 64], strides = [1, 1]} : vector<2x256xf32> to vector<2x64xf32>
    %180 = arith.mulf %177, %159 : vector<2x64xf32>
    %181 = arith.mulf %176, %179 : vector<2x64xf32>
    %182 = arith.addf %180, %181 : vector<2x64xf32>
    %183 = math.tanh %182 : vector<2x64xf32>
    %184 = arith.mulf %178, %183 : vector<2x64xf32>
    %185 = vector.extract_strided_slice %184 {offsets = [0, 0], sizes = [2, 32], strides = [1, 1]} : vector<2x64xf32> to vector<2x32xf32>
    %c10_41 = arith.constant 10 : index
    %c0_42 = arith.constant 0 : index
    %186 = vector.load %arg12[%c10_41, %c0_42] : memref<16x64xf32, #tpu.memory_space<vmem>>, vector<2x32xf32>
    tpu.vector_store %arg12[%c10_41, %c0_42], %185 {strides = array<i32>} : memref<16x64xf32, #tpu.memory_space<vmem>>, vector<2x32xf32>,
    %187 = vector.extract_strided_slice %184 {offsets = [0, 32], sizes = [2, 32], strides = [1, 1]} : vector<2x64xf32> to vector<2x32xf32>
    %c4_43 = arith.constant 4 : index
    %c32_44 = arith.constant 32 : index
    %188 = vector.load %arg12[%c4_43, %c32_44] : memref<16x64xf32, #tpu.memory_space<vmem>>, vector<2x32xf32>
    tpu.vector_store %arg12[%c4_43, %c32_44], %187 {strides = array<i32>} : memref<16x64xf32, #tpu.memory_space<vmem>>, vector<2x32xf32>,
    %189 = arith.truncf %184 : vector<2x64xf32> to vector<2x64xbf16>
    %cst_45 = arith.constant dense<0.000000e+00> : vector<2x256xf32>
    %190 = tpu.matmul %189, %46, %cst_45 {dimension_numbers = #tpu.dot_dimension_numbers<[1], [0], [0], [1], [0, 0, 1, 1], [], []>} : vector<2x64xbf16>, vector<64x256xbf16>, vector<2x256xf32> -> vector<2x256xf32>
    %191 = arith.addf %44, %190 : vector<2x256xf32>
    %192 = math.tanh %191 : vector<2x256xf32>
    %193 = arith.negf %191 : vector<2x256xf32>
    %194 = math.exp %193 : vector<2x256xf32>
    %cst_46 = arith.constant 1.000000e+00 : f32
    %195 = vector.broadcast %cst_46 : f32 to vector<2x256xf32>
    %196 = arith.addf %195, %194 : vector<2x256xf32>
    %197 = arith.divf %195, %196 : vector<2x256xf32>
    %198 = arith.select %2, %192, %197 : vector<2x256xi1>, vector<2x256xf32>
    %199 = vector.extract_strided_slice %198 {offsets = [0, 0], sizes = [2, 64], strides = [1, 1]} : vector<2x256xf32> to vector<2x64xf32>
    %200 = vector.extract_strided_slice %198 {offsets = [0, 64], sizes = [2, 64], strides = [1, 1]} : vector<2x256xf32> to vector<2x64xf32>
    %201 = vector.extract_strided_slice %198 {offsets = [0, 128], sizes = [2, 64], strides = [1, 1]} : vector<2x256xf32> to vector<2x64xf32>
    %202 = vector.extract_strided_slice %198 {offsets = [0, 192], sizes = [2, 64], strides = [1, 1]} : vector<2x256xf32> to vector<2x64xf32>
    %203 = arith.mulf %200, %182 : vector<2x64xf32>
    %204 = arith.mulf %199, %202 : vector<2x64xf32>
    %205 = arith.addf %203, %204 : vector<2x64xf32>
    %206 = math.tanh %205 : vector<2x64xf32>
    %207 = arith.mulf %201, %206 : vector<2x64xf32>
    %208 = vector.extract_strided_slice %207 {offsets = [0, 0], sizes = [2, 32], strides = [1, 1]} : vector<2x64xf32> to vector<2x32xf32>
    %c12_47 = arith.constant 12 : index
    %c0_48 = arith.constant 0 : index
    %209 = vector.load %arg12[%c12_47, %c0_48] : memref<16x64xf32, #tpu.memory_space<vmem>>, vector<2x32xf32>
    tpu.vector_store %arg12[%c12_47, %c0_48], %208 {strides = array<i32>} : memref<16x64xf32, #tpu.memory_space<vmem>>, vector<2x32xf32>,
    %210 = vector.extract_strided_slice %207 {offsets = [0, 32], sizes = [2, 32], strides = [1, 1]} : vector<2x64xf32> to vector<2x32xf32>
    %c2_49 = arith.constant 2 : index
    %c32_50 = arith.constant 32 : index
    %211 = vector.load %arg12[%c2_49, %c32_50] : memref<16x64xf32, #tpu.memory_space<vmem>>, vector<2x32xf32>
    tpu.vector_store %arg12[%c2_49, %c32_50], %210 {strides = array<i32>} : memref<16x64xf32, #tpu.memory_space<vmem>>, vector<2x32xf32>,
    %212 = arith.truncf %207 : vector<2x64xf32> to vector<2x64xbf16>
    %cst_51 = arith.constant dense<0.000000e+00> : vector<2x256xf32>
    %213 = tpu.matmul %212, %46, %cst_51 {dimension_numbers = #tpu.dot_dimension_numbers<[1], [0], [0], [1], [0, 0, 1, 1], [], []>} : vector<2x64xbf16>, vector<64x256xbf16>, vector<2x256xf32> -> vector<2x256xf32>
    %214 = arith.addf %45, %213 : vector<2x256xf32>
    %215 = math.tanh %214 : vector<2x256xf32>
    %216 = arith.negf %214 : vector<2x256xf32>
    %217 = math.exp %216 : vector<2x256xf32>
    %cst_52 = arith.constant 1.000000e+00 : f32
    %218 = vector.broadcast %cst_52 : f32 to vector<2x256xf32>
    %219 = arith.addf %218, %217 : vector<2x256xf32>
    %220 = arith.divf %218, %219 : vector<2x256xf32>
    %221 = arith.select %2, %215, %220 : vector<2x256xi1>, vector<2x256xf32>
    %222 = vector.extract_strided_slice %221 {offsets = [0, 0], sizes = [2, 64], strides = [1, 1]} : vector<2x256xf32> to vector<2x64xf32>
    %223 = vector.extract_strided_slice %221 {offsets = [0, 64], sizes = [2, 64], strides = [1, 1]} : vector<2x256xf32> to vector<2x64xf32>
    %224 = vector.extract_strided_slice %221 {offsets = [0, 128], sizes = [2, 64], strides = [1, 1]} : vector<2x256xf32> to vector<2x64xf32>
    %225 = vector.extract_strided_slice %221 {offsets = [0, 192], sizes = [2, 64], strides = [1, 1]} : vector<2x256xf32> to vector<2x64xf32>
    %226 = arith.mulf %223, %205 : vector<2x64xf32>
    %227 = arith.mulf %222, %225 : vector<2x64xf32>
    %228 = arith.addf %226, %227 : vector<2x64xf32>
    %229 = math.tanh %228 : vector<2x64xf32>
    %230 = arith.mulf %224, %229 : vector<2x64xf32>
    %231 = vector.extract_strided_slice %230 {offsets = [0, 0], sizes = [2, 32], strides = [1, 1]} : vector<2x64xf32> to vector<2x32xf32>
    %c14_53 = arith.constant 14 : index
    %c0_54 = arith.constant 0 : index
    %232 = vector.load %arg12[%c14_53, %c0_54] : memref<16x64xf32, #tpu.memory_space<vmem>>, vector<2x32xf32>
    tpu.vector_store %arg12[%c14_53, %c0_54], %231 {strides = array<i32>} : memref<16x64xf32, #tpu.memory_space<vmem>>, vector<2x32xf32>,
    %233 = vector.extract_strided_slice %230 {offsets = [0, 32], sizes = [2, 32], strides = [1, 1]} : vector<2x64xf32> to vector<2x32xf32>
    %c0_55 = arith.constant 0 : index
    %c32_56 = arith.constant 32 : index
    %234 = vector.load %arg12[%c0_55, %c32_56] : memref<16x64xf32, #tpu.memory_space<vmem>>, vector<2x32xf32>
    tpu.vector_store %arg12[%c0_55, %c32_56], %233 {strides = array<i32>} : memref<16x64xf32, #tpu.memory_space<vmem>>, vector<2x32xf32>,
    %c0_57 = arith.constant 0 : index
    %c0_58 = arith.constant 0 : index
    %235 = vector.load %arg12[%c0_57, %c0_58] : memref<16x64xf32, #tpu.memory_space<vmem>>, vector<16x64xf32>
    %236 = arith.truncf %235 : vector<16x64xf32> to vector<16x64xbf16>
    %c0_59 = arith.constant 0 : index
    %c0_60 = arith.constant 0 : index
    %237 = vector.load %arg4[%c0_59, %c0_60] : memref<64x256xbf16, #tpu.memory_space<vmem>>, vector<64x256xbf16>
    %cst_61 = arith.constant dense<0.000000e+00> : vector<16x256xf32>
    %238 = tpu.matmul %236, %237, %cst_61 {dimension_numbers = #tpu.dot_dimension_numbers<[1], [0], [0], [1], [0, 0, 1, 1], [], []>} : vector<16x64xbf16>, vector<64x256xbf16>, vector<16x256xf32> -> vector<16x256xf32>
    %c0_62 = arith.constant 0 : index
    %c0_63 = arith.constant 0 : index
    %239 = vector.load %arg6[%c0_62, %c0_63] : memref<1x256xf32, #tpu.memory_space<vmem>>, vector<1x256xf32>
    %240 = vector.broadcast %239 : vector<1x256xf32> to vector<16x256xf32>
    %241 = arith.addf %238, %240 : vector<16x256xf32>
    %242 = vector.extract_strided_slice %241 {offsets = [0, 0], sizes = [2, 256], strides = [1, 1]} : vector<16x256xf32> to vector<2x256xf32>
    %243 = vector.extract_strided_slice %241 {offsets = [2, 0], sizes = [2, 256], strides = [1, 1]} : vector<16x256xf32> to vector<2x256xf32>
    %244 = vector.extract_strided_slice %241 {offsets = [4, 0], sizes = [2, 256], strides = [1, 1]} : vector<16x256xf32> to vector<2x256xf32>
    %245 = vector.extract_strided_slice %241 {offsets = [6, 0], sizes = [2, 256], strides = [1, 1]} : vector<16x256xf32> to vector<2x256xf32>
    %246 = vector.extract_strided_slice %241 {offsets = [8, 0], sizes = [2, 256], strides = [1, 1]} : vector<16x256xf32> to vector<2x256xf32>
    %247 = vector.extract_strided_slice %241 {offsets = [10, 0], sizes = [2, 256], strides = [1, 1]} : vector<16x256xf32> to vector<2x256xf32>
    %248 = vector.extract_strided_slice %241 {offsets = [12, 0], sizes = [2, 256], strides = [1, 1]} : vector<16x256xf32> to vector<2x256xf32>
    %249 = vector.extract_strided_slice %241 {offsets = [14, 0], sizes = [2, 256], strides = [1, 1]} : vector<16x256xf32> to vector<2x256xf32>
    %250 = arith.select %20, %242, %249 : vector<2x256xi1>, vector<2x256xf32>
    %251 = arith.select %20, %243, %248 : vector<2x256xi1>, vector<2x256xf32>
    %252 = arith.select %20, %244, %247 : vector<2x256xi1>, vector<2x256xf32>
    %253 = arith.select %20, %245, %246 : vector<2x256xi1>, vector<2x256xf32>
    %254 = arith.select %20, %246, %245 : vector<2x256xi1>, vector<2x256xf32>
    %255 = arith.select %20, %247, %244 : vector<2x256xi1>, vector<2x256xf32>
    %256 = arith.select %20, %248, %243 : vector<2x256xi1>, vector<2x256xf32>
    %257 = arith.select %20, %249, %242 : vector<2x256xi1>, vector<2x256xf32>
    %c0_64 = arith.constant 0 : index
    %c0_65 = arith.constant 0 : index
    %258 = vector.load %arg5[%c0_64, %c0_65] : memref<64x256xbf16, #tpu.memory_space<vmem>>, vector<64x256xbf16>
    %c1 = arith.constant 1 : index
    %c0_66 = arith.constant 0 : index
    %c0_67 = arith.constant 0 : index
    %259 = vector.load %arg7[%c1, %c0_66, %c0_67] : memref<2x2x64xf32, #tpu.memory_space<vmem>>, vector<1x2x64xf32>
    %260 = vector.shape_cast %259 : vector<1x2x64xf32> to vector<2x64xf32>
    %c1_68 = arith.constant 1 : index
    %c0_69 = arith.constant 0 : index
    %c0_70 = arith.constant 0 : index
    %261 = vector.load %arg8[%c1_68, %c0_69, %c0_70] : memref<2x2x64xf32, #tpu.memory_space<vmem>>, vector<1x2x64xf32>
    %262 = vector.shape_cast %261 : vector<1x2x64xf32> to vector<2x64xf32>
    %263 = arith.truncf %260 : vector<2x64xf32> to vector<2x64xbf16>
    %cst_71 = arith.constant dense<0.000000e+00> : vector<2x256xf32>
    %264 = tpu.matmul %263, %258, %cst_71 {dimension_numbers = #tpu.dot_dimension_numbers<[1], [0], [0], [1], [0, 0, 1, 1], [], []>} : vector<2x64xbf16>, vector<64x256xbf16>, vector<2x256xf32> -> vector<2x256xf32>
    %265 = arith.addf %250, %264 : vector<2x256xf32>
    %266 = math.tanh %265 : vector<2x256xf32>
    %267 = arith.negf %265 : vector<2x256xf32>
    %268 = math.exp %267 : vector<2x256xf32>
    %cst_72 = arith.constant 1.000000e+00 : f32
    %269 = vector.broadcast %cst_72 : f32 to vector<2x256xf32>
    %270 = arith.addf %269, %268 : vector<2x256xf32>
    %271 = arith.divf %269, %270 : vector<2x256xf32>
    %272 = arith.select %2, %266, %271 : vector<2x256xi1>, vector<2x256xf32>
    %273 = vector.extract_strided_slice %272 {offsets = [0, 0], sizes = [2, 64], strides = [1, 1]} : vector<2x256xf32> to vector<2x64xf32>
    %274 = vector.extract_strided_slice %272 {offsets = [0, 64], sizes = [2, 64], strides = [1, 1]} : vector<2x256xf32> to vector<2x64xf32>
    %275 = vector.extract_strided_slice %272 {offsets = [0, 128], sizes = [2, 64], strides = [1, 1]} : vector<2x256xf32> to vector<2x64xf32>
    %276 = vector.extract_strided_slice %272 {offsets = [0, 192], sizes = [2, 64], strides = [1, 1]} : vector<2x256xf32> to vector<2x64xf32>
    %277 = arith.mulf %274, %262 : vector<2x64xf32>
    %278 = arith.mulf %273, %276 : vector<2x64xf32>
    %279 = arith.addf %277, %278 : vector<2x64xf32>
    %280 = math.tanh %279 : vector<2x64xf32>
    %281 = arith.mulf %275, %280 : vector<2x64xf32>
    %282 = arith.truncf %281 : vector<2x64xf32> to vector<2x64xbf16>
    %cst_73 = arith.constant dense<0.000000e+00> : vector<2x256xf32>
    %283 = tpu.matmul %282, %258, %cst_73 {dimension_numbers = #tpu.dot_dimension_numbers<[1], [0], [0], [1], [0, 0, 1, 1], [], []>} : vector<2x64xbf16>, vector<64x256xbf16>, vector<2x256xf32> -> vector<2x256xf32>
    %284 = arith.addf %251, %283 : vector<2x256xf32>
    %285 = math.tanh %284 : vector<2x256xf32>
    %286 = arith.negf %284 : vector<2x256xf32>
    %287 = math.exp %286 : vector<2x256xf32>
    %cst_74 = arith.constant 1.000000e+00 : f32
    %288 = vector.broadcast %cst_74 : f32 to vector<2x256xf32>
    %289 = arith.addf %288, %287 : vector<2x256xf32>
    %290 = arith.divf %288, %289 : vector<2x256xf32>
    %291 = arith.select %2, %285, %290 : vector<2x256xi1>, vector<2x256xf32>
    %292 = vector.extract_strided_slice %291 {offsets = [0, 0], sizes = [2, 64], strides = [1, 1]} : vector<2x256xf32> to vector<2x64xf32>
    %293 = vector.extract_strided_slice %291 {offsets = [0, 64], sizes = [2, 64], strides = [1, 1]} : vector<2x256xf32> to vector<2x64xf32>
    %294 = vector.extract_strided_slice %291 {offsets = [0, 128], sizes = [2, 64], strides = [1, 1]} : vector<2x256xf32> to vector<2x64xf32>
    %295 = vector.extract_strided_slice %291 {offsets = [0, 192], sizes = [2, 64], strides = [1, 1]} : vector<2x256xf32> to vector<2x64xf32>
    %296 = arith.mulf %293, %279 : vector<2x64xf32>
    %297 = arith.mulf %292, %295 : vector<2x64xf32>
    %298 = arith.addf %296, %297 : vector<2x64xf32>
    %299 = math.tanh %298 : vector<2x64xf32>
    %300 = arith.mulf %294, %299 : vector<2x64xf32>
    %301 = arith.truncf %300 : vector<2x64xf32> to vector<2x64xbf16>
    %cst_75 = arith.constant dense<0.000000e+00> : vector<2x256xf32>
    %302 = tpu.matmul %301, %258, %cst_75 {dimension_numbers = #tpu.dot_dimension_numbers<[1], [0], [0], [1], [0, 0, 1, 1], [], []>} : vector<2x64xbf16>, vector<64x256xbf16>, vector<2x256xf32> -> vector<2x256xf32>
    %303 = arith.addf %252, %302 : vector<2x256xf32>
    %304 = math.tanh %303 : vector<2x256xf32>
    %305 = arith.negf %303 : vector<2x256xf32>
    %306 = math.exp %305 : vector<2x256xf32>
    %cst_76 = arith.constant 1.000000e+00 : f32
    %307 = vector.broadcast %cst_76 : f32 to vector<2x256xf32>
    %308 = arith.addf %307, %306 : vector<2x256xf32>
    %309 = arith.divf %307, %308 : vector<2x256xf32>
    %310 = arith.select %2, %304, %309 : vector<2x256xi1>, vector<2x256xf32>
    %311 = vector.extract_strided_slice %310 {offsets = [0, 0], sizes = [2, 64], strides = [1, 1]} : vector<2x256xf32> to vector<2x64xf32>
    %312 = vector.extract_strided_slice %310 {offsets = [0, 64], sizes = [2, 64], strides = [1, 1]} : vector<2x256xf32> to vector<2x64xf32>
    %313 = vector.extract_strided_slice %310 {offsets = [0, 128], sizes = [2, 64], strides = [1, 1]} : vector<2x256xf32> to vector<2x64xf32>
    %314 = vector.extract_strided_slice %310 {offsets = [0, 192], sizes = [2, 64], strides = [1, 1]} : vector<2x256xf32> to vector<2x64xf32>
    %315 = arith.mulf %312, %298 : vector<2x64xf32>
    %316 = arith.mulf %311, %314 : vector<2x64xf32>
    %317 = arith.addf %315, %316 : vector<2x64xf32>
    %318 = math.tanh %317 : vector<2x64xf32>
    %319 = arith.mulf %313, %318 : vector<2x64xf32>
    %320 = arith.truncf %319 : vector<2x64xf32> to vector<2x64xbf16>
    %cst_77 = arith.constant dense<0.000000e+00> : vector<2x256xf32>
    %321 = tpu.matmul %320, %258, %cst_77 {dimension_numbers = #tpu.dot_dimension_numbers<[1], [0], [0], [1], [0, 0, 1, 1], [], []>} : vector<2x64xbf16>, vector<64x256xbf16>, vector<2x256xf32> -> vector<2x256xf32>
    %322 = arith.addf %253, %321 : vector<2x256xf32>
    %323 = math.tanh %322 : vector<2x256xf32>
    %324 = arith.negf %322 : vector<2x256xf32>
    %325 = math.exp %324 : vector<2x256xf32>
    %cst_78 = arith.constant 1.000000e+00 : f32
    %326 = vector.broadcast %cst_78 : f32 to vector<2x256xf32>
    %327 = arith.addf %326, %325 : vector<2x256xf32>
    %328 = arith.divf %326, %327 : vector<2x256xf32>
    %329 = arith.select %2, %323, %328 : vector<2x256xi1>, vector<2x256xf32>
    %330 = vector.extract_strided_slice %329 {offsets = [0, 0], sizes = [2, 64], strides = [1, 1]} : vector<2x256xf32> to vector<2x64xf32>
    %331 = vector.extract_strided_slice %329 {offsets = [0, 64], sizes = [2, 64], strides = [1, 1]} : vector<2x256xf32> to vector<2x64xf32>
    %332 = vector.extract_strided_slice %329 {offsets = [0, 128], sizes = [2, 64], strides = [1, 1]} : vector<2x256xf32> to vector<2x64xf32>
    %333 = vector.extract_strided_slice %329 {offsets = [0, 192], sizes = [2, 64], strides = [1, 1]} : vector<2x256xf32> to vector<2x64xf32>
    %334 = arith.mulf %331, %317 : vector<2x64xf32>
    %335 = arith.mulf %330, %333 : vector<2x64xf32>
    %336 = arith.addf %334, %335 : vector<2x64xf32>
    %337 = math.tanh %336 : vector<2x64xf32>
    %338 = arith.mulf %332, %337 : vector<2x64xf32>
    %339 = arith.truncf %338 : vector<2x64xf32> to vector<2x64xbf16>
    %cst_79 = arith.constant dense<0.000000e+00> : vector<2x256xf32>
    %340 = tpu.matmul %339, %258, %cst_79 {dimension_numbers = #tpu.dot_dimension_numbers<[1], [0], [0], [1], [0, 0, 1, 1], [], []>} : vector<2x64xbf16>, vector<64x256xbf16>, vector<2x256xf32> -> vector<2x256xf32>
    %341 = arith.addf %254, %340 : vector<2x256xf32>
    %342 = math.tanh %341 : vector<2x256xf32>
    %343 = arith.negf %341 : vector<2x256xf32>
    %344 = math.exp %343 : vector<2x256xf32>
    %cst_80 = arith.constant 1.000000e+00 : f32
    %345 = vector.broadcast %cst_80 : f32 to vector<2x256xf32>
    %346 = arith.addf %345, %344 : vector<2x256xf32>
    %347 = arith.divf %345, %346 : vector<2x256xf32>
    %348 = arith.select %2, %342, %347 : vector<2x256xi1>, vector<2x256xf32>
    %349 = vector.extract_strided_slice %348 {offsets = [0, 0], sizes = [2, 64], strides = [1, 1]} : vector<2x256xf32> to vector<2x64xf32>
    %350 = vector.extract_strided_slice %348 {offsets = [0, 64], sizes = [2, 64], strides = [1, 1]} : vector<2x256xf32> to vector<2x64xf32>
    %351 = vector.extract_strided_slice %348 {offsets = [0, 128], sizes = [2, 64], strides = [1, 1]} : vector<2x256xf32> to vector<2x64xf32>
    %352 = vector.extract_strided_slice %348 {offsets = [0, 192], sizes = [2, 64], strides = [1, 1]} : vector<2x256xf32> to vector<2x64xf32>
    %353 = arith.mulf %350, %336 : vector<2x64xf32>
    %354 = arith.mulf %349, %352 : vector<2x64xf32>
    %355 = arith.addf %353, %354 : vector<2x64xf32>
    %356 = math.tanh %355 : vector<2x64xf32>
    %357 = arith.mulf %351, %356 : vector<2x64xf32>
    %358 = arith.truncf %357 : vector<2x64xf32> to vector<2x64xbf16>
    %cst_81 = arith.constant dense<0.000000e+00> : vector<2x256xf32>
    %359 = tpu.matmul %358, %258, %cst_81 {dimension_numbers = #tpu.dot_dimension_numbers<[1], [0], [0], [1], [0, 0, 1, 1], [], []>} : vector<2x64xbf16>, vector<64x256xbf16>, vector<2x256xf32> -> vector<2x256xf32>
    %360 = arith.addf %255, %359 : vector<2x256xf32>
    %361 = math.tanh %360 : vector<2x256xf32>
    %362 = arith.negf %360 : vector<2x256xf32>
    %363 = math.exp %362 : vector<2x256xf32>
    %cst_82 = arith.constant 1.000000e+00 : f32
    %364 = vector.broadcast %cst_82 : f32 to vector<2x256xf32>
    %365 = arith.addf %364, %363 : vector<2x256xf32>
    %366 = arith.divf %364, %365 : vector<2x256xf32>
    %367 = arith.select %2, %361, %366 : vector<2x256xi1>, vector<2x256xf32>
    %368 = vector.extract_strided_slice %367 {offsets = [0, 0], sizes = [2, 64], strides = [1, 1]} : vector<2x256xf32> to vector<2x64xf32>
    %369 = vector.extract_strided_slice %367 {offsets = [0, 64], sizes = [2, 64], strides = [1, 1]} : vector<2x256xf32> to vector<2x64xf32>
    %370 = vector.extract_strided_slice %367 {offsets = [0, 128], sizes = [2, 64], strides = [1, 1]} : vector<2x256xf32> to vector<2x64xf32>
    %371 = vector.extract_strided_slice %367 {offsets = [0, 192], sizes = [2, 64], strides = [1, 1]} : vector<2x256xf32> to vector<2x64xf32>
    %372 = arith.mulf %369, %355 : vector<2x64xf32>
    %373 = arith.mulf %368, %371 : vector<2x64xf32>
    %374 = arith.addf %372, %373 : vector<2x64xf32>
    %375 = math.tanh %374 : vector<2x64xf32>
    %376 = arith.mulf %370, %375 : vector<2x64xf32>
    %377 = arith.truncf %376 : vector<2x64xf32> to vector<2x64xbf16>
    %cst_83 = arith.constant dense<0.000000e+00> : vector<2x256xf32>
    %378 = tpu.matmul %377, %258, %cst_83 {dimension_numbers = #tpu.dot_dimension_numbers<[1], [0], [0], [1], [0, 0, 1, 1], [], []>} : vector<2x64xbf16>, vector<64x256xbf16>, vector<2x256xf32> -> vector<2x256xf32>
    %379 = arith.addf %256, %378 : vector<2x256xf32>
    %380 = math.tanh %379 : vector<2x256xf32>
    %381 = arith.negf %379 : vector<2x256xf32>
    %382 = math.exp %381 : vector<2x256xf32>
    %cst_84 = arith.constant 1.000000e+00 : f32
    %383 = vector.broadcast %cst_84 : f32 to vector<2x256xf32>
    %384 = arith.addf %383, %382 : vector<2x256xf32>
    %385 = arith.divf %383, %384 : vector<2x256xf32>
    %386 = arith.select %2, %380, %385 : vector<2x256xi1>, vector<2x256xf32>
    %387 = vector.extract_strided_slice %386 {offsets = [0, 0], sizes = [2, 64], strides = [1, 1]} : vector<2x256xf32> to vector<2x64xf32>
    %388 = vector.extract_strided_slice %386 {offsets = [0, 64], sizes = [2, 64], strides = [1, 1]} : vector<2x256xf32> to vector<2x64xf32>
    %389 = vector.extract_strided_slice %386 {offsets = [0, 128], sizes = [2, 64], strides = [1, 1]} : vector<2x256xf32> to vector<2x64xf32>
    %390 = vector.extract_strided_slice %386 {offsets = [0, 192], sizes = [2, 64], strides = [1, 1]} : vector<2x256xf32> to vector<2x64xf32>
    %391 = arith.mulf %388, %374 : vector<2x64xf32>
    %392 = arith.mulf %387, %390 : vector<2x64xf32>
    %393 = arith.addf %391, %392 : vector<2x64xf32>
    %394 = math.tanh %393 : vector<2x64xf32>
    %395 = arith.mulf %389, %394 : vector<2x64xf32>
    %396 = arith.truncf %395 : vector<2x64xf32> to vector<2x64xbf16>
    %cst_85 = arith.constant dense<0.000000e+00> : vector<2x256xf32>
    %397 = tpu.matmul %396, %258, %cst_85 {dimension_numbers = #tpu.dot_dimension_numbers<[1], [0], [0], [1], [0, 0, 1, 1], [], []>} : vector<2x64xbf16>, vector<64x256xbf16>, vector<2x256xf32> -> vector<2x256xf32>
    %398 = arith.addf %257, %397 : vector<2x256xf32>
    %399 = math.tanh %398 : vector<2x256xf32>
    %400 = arith.negf %398 : vector<2x256xf32>
    %401 = math.exp %400 : vector<2x256xf32>
    %cst_86 = arith.constant 1.000000e+00 : f32
    %402 = vector.broadcast %cst_86 : f32 to vector<2x256xf32>
    %403 = arith.addf %402, %401 : vector<2x256xf32>
    %404 = arith.divf %402, %403 : vector<2x256xf32>
    %405 = arith.select %2, %399, %404 : vector<2x256xi1>, vector<2x256xf32>
    %406 = vector.extract_strided_slice %405 {offsets = [0, 0], sizes = [2, 64], strides = [1, 1]} : vector<2x256xf32> to vector<2x64xf32>
    %407 = vector.extract_strided_slice %405 {offsets = [0, 64], sizes = [2, 64], strides = [1, 1]} : vector<2x256xf32> to vector<2x64xf32>
    %408 = vector.extract_strided_slice %405 {offsets = [0, 128], sizes = [2, 64], strides = [1, 1]} : vector<2x256xf32> to vector<2x64xf32>
    %409 = vector.extract_strided_slice %405 {offsets = [0, 192], sizes = [2, 64], strides = [1, 1]} : vector<2x256xf32> to vector<2x64xf32>
    %410 = arith.mulf %407, %393 : vector<2x64xf32>
    %411 = arith.mulf %406, %409 : vector<2x64xf32>
    %412 = arith.addf %410, %411 : vector<2x64xf32>
    %413 = math.tanh %412 : vector<2x64xf32>
    %414 = arith.mulf %408, %413 : vector<2x64xf32>
    %415 = arith.select %23, %414, %281 : vector<2x64xi1>, vector<2x64xf32>
    %416 = arith.truncf %415 : vector<2x64xf32> to vector<2x64xbf16>
    %c0_87 = arith.constant 0 : index
    %c0_88 = arith.constant 0 : index
    %417 = vector.load %arg9[%c0_87, %c0_88] : memref<64x128xbf16, #tpu.memory_space<vmem>>, vector<64x128xbf16>
    %cst_89 = arith.constant dense<0.000000e+00> : vector<2x128xf32>
    %418 = tpu.matmul %416, %417, %cst_89 {dimension_numbers = #tpu.dot_dimension_numbers<[1], [0], [0], [1], [0, 0, 1, 1], [], []>} : vector<2x64xbf16>, vector<64x128xbf16>, vector<2x128xf32> -> vector<2x128xf32>
    %c0_90 = arith.constant 0 : index
    %c0_91 = arith.constant 0 : index
    %419 = vector.load %arg10[%c0_90, %c0_91] : memref<1x128xf32, #tpu.memory_space<vmem>>, vector<1x128xf32>
    %420 = vector.broadcast %419 : vector<1x128xf32> to vector<2x128xf32>
    %421 = arith.addf %418, %420 : vector<2x128xf32>
    %c0_92 = arith.constant 0 : index
    %c0_93 = arith.constant 0 : index
    %422 = vector.load %arg11[%c0_92, %c0_93] : memref<2x128xf32, #tpu.memory_space<vmem>>, vector<2x128xf32>
    tpu.vector_store %arg11[%c0_92, %c0_93], %421 {strides = array<i32>} : memref<2x128xf32, #tpu.memory_space<vmem>>, vector<2x128xf32>,
    return
  }
}

</mosaic_0001>

<llo_original>
// kernel: tpu_custom_call.1
$region0: #{tpu_custom_call.1}
  #allocation0 [shape = 'u32[]', space=smem, size = 0x4, offset = 0x4, fixed_abs, tag = 'smem constant byte address 0x4 - core index']
  #allocation1 [shape = 'u32[144,128]{1,0:T(1,128)}', space=vmem, size = 0x12000, scoped, tag = 'internal scratch']
  #allocation2 [shape = 'f32[16,64]{1,0:T(8,128)}', space=vmem, size = 0x2000, scoped, tag = 'scratch operand']
  %s0 = inlined_call_operand.hbm [shape: bf16[16,16], index: 0, kind: input, shape index: {}]
  %s1 = inlined_call_operand.hbm [shape: bf16[16,256], index: 1, kind: input, shape index: {}]
  %s2 = inlined_call_operand.hbm [shape: bf16[64,256], index: 2, kind: input, shape index: {}]
  %s3 = inlined_call_operand.vmem [shape: f32[1,256], index: 3, kind: input, shape index: {}]
  %s4 = inlined_call_operand.hbm [shape: bf16[64,256], index: 4, kind: input, shape index: {}]
  %s5 = inlined_call_operand.hbm [shape: bf16[64,256], index: 5, kind: input, shape index: {}]
  %s6 = inlined_call_operand.hbm [shape: f32[1,256], index: 6, kind: input, shape index: {}]
  %s7 = inlined_call_operand.hbm [shape: f32[2,2,64], index: 7, kind: input, shape index: {}]
  %s8 = inlined_call_operand.hbm [shape: f32[2,2,64], index: 8, kind: input, shape index: {}]
  %s9 = inlined_call_operand.vmem [shape: bf16[64,128], index: 9, kind: input, shape index: {}]
  %s10 = inlined_call_operand.vmem [shape: f32[1,128], index: 10, kind: input, shape index: {}]
  %s11 = inlined_call_operand.hbm [shape: f32[2,128], index: 11, kind: output, shape index: {}]
  %s12 = sld [smem:[#allocation0]]
  $region86: #{tpu_custom_call.1} parent=0
    _
  %s14 = ssub.s32 1, %s12
  %s15 = scalar_select 0, %s14, %s12
  $region1: #{tpu_custom_call.1} parent=0
    #allocation3 [shape = 'u8[4096]{0}', space=vmem, size = 0x1000, scoped, tag = 'input window, operand 0, single buffered']
    #allocation4 [shape = 's32[1]{0}', space=sflag, size = 0x4, scoped, tag = 'scoped memory for tpu_custom_call.1']
    #allocation5 [shape = 's32[1]{0}', space=sflag, size = 0x4, scoped, tag = 'scoped memory for tpu_custom_call.1']
    #allocation6 [shape = 'u8[8192]{0}', space=vmem, size = 0x2000, scoped, tag = 'input window, operand 1, single buffered']
    #allocation7 [shape = 's32[1]{0}', space=sflag, size = 0x4, scoped, tag = 'scoped memory for tpu_custom_call.1']
    #allocation8 [shape = 'u8[32768]{0}', space=vmem, size = 0x8000, scoped, tag = 'input window, operand 2, single buffered']
    #allocation9 [shape = 'u8[32768]{0}', space=vmem, size = 0x8000, scoped, tag = 'input window, operand 4, single buffered']
    #allocation10 [shape = 's32[1]{0}', space=sflag, size = 0x4, scoped, tag = 'scoped memory for tpu_custom_call.1']
    #allocation11 [shape = 'u8[32768]{0}', space=vmem, size = 0x8000, scoped, tag = 'input window, operand 5, single buffered']
    #allocation12 [shape = 'u8[1024]{0}', space=vmem, size = 0x400, scoped, tag = 'input window, operand 6, single buffered']
    #allocation13 [shape = 's32[1]{0}', space=sflag, size = 0x4, scoped, tag = 'scoped memory for tpu_custom_call.1']
    #allocation14 [shape = 'u8[2048]{0}', space=vmem, size = 0x800, scoped, tag = 'input window, operand 7, single buffered']
    #allocation15 [shape = 'u8[2048]{0}', space=vmem, size = 0x800, scoped, tag = 'input window, operand 8, single buffered']
    #allocation16 [shape = 's32[1]{0}', space=sflag, size = 0x4, scoped, tag = 'scoped memory for tpu_custom_call.1']
    #allocation17 [shape = 'u8[1024]{0}', space=vmem, size = 0x400, scoped, tag = 'output window, operand 0, single buffered']
    %16 = vsyncpa [#allocation4], 0
    %17 = vsyncpa [#allocation7], 0
    %18 = vsyncpa [#allocation10], 0
    %19 = vsyncpa [#allocation13], 0
    %20 = vsyncpa [#allocation16], 0
    %21 = vsyncpa [#allocation5], 0
    // Predicated region
    $region2: #{tpu_custom_call.1} parent=1 // pred_check
      _
    $region3: #{tpu_custom_call.1} parent=1 // pred_check_branch
      %23 = sbr.rel (0) target = $region5
    $region4: #{tpu_custom_call.1} parent=1 // pred_region
      %s25 = ssub.s32 128, 128
      %26 = vsyncadd [#allocation4], %s25
      %s27 = sshll.u32 [#allocation3], 4
      %s28 = int_to_ptr.vmem [resolvable:$true] %s27
      %33 = dma.hbm_to_vmem [thread:$0]  %s0, 128, %s28, [#allocation4], 64, 64, 4
    $region5: #{tpu_custom_call.1} parent=1 // pred_fallthru
      _
    // Predicated region
    $region6: #{tpu_custom_call.1} parent=1 // pred_check
      _
    $region7: #{tpu_custom_call.1} parent=1 // pred_check_branch
      %35 = sbr.rel (0) target = $region9
    $region8: #{tpu_custom_call.1} parent=1 // pred_region
      %s37 = ssub.s32 256, 256
      %38 = vsyncadd [#allocation7], %s37
      %s39 = sshll.u32 [#allocation6], 4
      %s40 = int_to_ptr.vmem [resolvable:$true] %s39
      %45 = dma.hbm_to_vmem [thread:$0]  %s1, 256, %s40, [#allocation7], 128, 128, 8
    $region9: #{tpu_custom_call.1} parent=1 // pred_fallthru
      _
    // Predicated region
    $region10: #{tpu_custom_call.1} parent=1 // pred_check
      _
    $region11: #{tpu_custom_call.1} parent=1 // pred_check_branch
      %47 = sbr.rel (0) target = $region13
    $region12: #{tpu_custom_call.1} parent=1 // pred_region
      %s49 = ssub.s32 1024, 1024
      %50 = vsyncadd [#allocation7], %s49
      %s51 = sshll.u32 [#allocation8], 4
      %s52 = int_to_ptr.vmem [resolvable:$true] %s51
      %57 = dma.hbm_to_vmem [thread:$0]  %s2, 1024, %s52, [#allocation7], 128, 128, 8
    $region13: #{tpu_custom_call.1} parent=1 // pred_fallthru
      _
    // Predicated region
    $region14: #{tpu_custom_call.1} parent=1 // pred_check
      _
    $region15: #{tpu_custom_call.1} parent=1 // pred_check_branch
      %59 = sbr.rel (0) target = $region17
    $region16: #{tpu_custom_call.1} parent=1 // pred_region
      _
    $region17: #{tpu_custom_call.1} parent=1 // pred_fallthru
      _
    // Predicated region
    $region18: #{tpu_custom_call.1} parent=1 // pred_check
      _
    $region19: #{tpu_custom_call.1} parent=1 // pred_check_branch
      %61 = sbr.rel (0) target = $region21
    $region20: #{tpu_custom_call.1} parent=1 // pred_region
      %s63 = ssub.s32 1024, 1024
      %64 = vsyncadd [#allocation10], %s63
      %s65 = sshll.u32 [#allocation9], 4
      %s66 = int_to_ptr.vmem [resolvable:$true] %s65
      %71 = dma.hbm_to_vmem [thread:$0]  %s4, 1024, %s66, [#allocation10], 128, 128, 8
    $region21: #{tpu_custom_call.1} parent=1 // pred_fallthru
      _
    // Predicated region
    $region22: #{tpu_custom_call.1} parent=1 // pred_check
      _
    $region23: #{tpu_custom_call.1} parent=1 // pred_check_branch
      %73 = sbr.rel (0) target = $region25
    $region24: #{tpu_custom_call.1} parent=1 // pred_region
      %s75 = ssub.s32 1024, 1024
      %76 = vsyncadd [#allocation10], %s75
      %s77 = sshll.u32 [#allocation11], 4
      %s78 = int_to_ptr.vmem [resolvable:$true] %s77
      %83 = dma.hbm_to_vmem [thread:$0]  %s5, 1024, %s78, [#allocation10], 128, 128, 8
    $region25: #{tpu_custom_call.1} parent=1 // pred_fallthru
      _
    // Predicated region
    $region26: #{tpu_custom_call.1} parent=1 // pred_check
      _
    $region27: #{tpu_custom_call.1} parent=1 // pred_check_branch
      %85 = sbr.rel (0) target = $region29
    $region28: #{tpu_custom_call.1} parent=1 // pred_region
      %s87 = ssub.s32 32, 32
      %88 = vsyncadd [#allocation13], %s87
      %s90 = sshll.u32 [#allocation12], 4
      %s91 = int_to_ptr.vmem [resolvable:$true] %s90
      %93 = dma.hbm_to_vmem [thread:$0]  %s6, 32, %s91, [#allocation13]
    $region29: #{tpu_custom_call.1} parent=1 // pred_fallthru
      _
    // Predicated region
    $region30: #{tpu_custom_call.1} parent=1 // pred_check
      _
    $region31: #{tpu_custom_call.1} parent=1 // pred_check_branch
      %95 = sbr.rel (0) target = $region33
    $region32: #{tpu_custom_call.1} parent=1 // pred_region
      %s97 = ssub.s32 64, 64
      %98 = vsyncadd [#allocation13], %s97
      %s99 = sshll.u32 [#allocation14], 4
      %s100 = int_to_ptr.vmem [resolvable:$true] %s99
      %105 = dma.hbm_to_vmem [thread:$0]  %s7, 64, %s100, [#allocation13], 32, 32, 2
    $region33: #{tpu_custom_call.1} parent=1 // pred_fallthru
      _
    // Predicated region
    $region34: #{tpu_custom_call.1} parent=1 // pred_check
      _
    $region35: #{tpu_custom_call.1} parent=1 // pred_check_branch
      %107 = sbr.rel (0) target = $region37
    $region36: #{tpu_custom_call.1} parent=1 // pred_region
      %s109 = ssub.s32 64, 64
      %110 = vsyncadd [#allocation16], %s109
      %s111 = sshll.u32 [#allocation15], 4
      %s112 = int_to_ptr.vmem [resolvable:$true] %s111
      %117 = dma.hbm_to_vmem [thread:$0]  %s8, 64, %s112, [#allocation16], 32, 32, 2
    $region37: #{tpu_custom_call.1} parent=1 // pred_fallthru
      _
    // Predicated region
    $region38: #{tpu_custom_call.1} parent=1 // pred_check
      _
    $region39: #{tpu_custom_call.1} parent=1 // pred_check_branch
      %119 = sbr.rel (0) target = $region41
    $region40: #{tpu_custom_call.1} parent=1 // pred_region
      _
    $region41: #{tpu_custom_call.1} parent=1 // pred_fallthru
      _
    // Predicated region
    $region42: #{tpu_custom_call.1} parent=1 // pred_check
      _
    $region43: #{tpu_custom_call.1} parent=1 // pred_check_branch
      %121 = sbr.rel (0) target = $region45
    $region44: #{tpu_custom_call.1} parent=1 // pred_region
      _
    $region45: #{tpu_custom_call.1} parent=1 // pred_fallthru
      _
    // Predicated region
    $region46: #{tpu_custom_call.1} parent=1 // pred_check
      _
    $region47: #{tpu_custom_call.1} parent=1 // pred_check_branch
      %123 = sbr.rel (0) target = $region49
    $region48: #{tpu_custom_call.1} parent=1 // pred_region
      %124 = dma.done [#allocation4], 128
    $region49: #{tpu_custom_call.1} parent=1 // pred_fallthru
      _
    // Predicated region
    $region50: #{tpu_custom_call.1} parent=1 // pred_check
      _
    $region51: #{tpu_custom_call.1} parent=1 // pred_check_branch
      %126 = sbr.rel (0) target = $region53
    $region52: #{tpu_custom_call.1} parent=1 // pred_region
      %127 = dma.done [#allocation7], 256
    $region53: #{tpu_custom_call.1} parent=1 // pred_fallthru
      _
    // Predicated region
    $region54: #{tpu_custom_call.1} parent=1 // pred_check
      _
    $region55: #{tpu_custom_call.1} parent=1 // pred_check_branch
      %129 = sbr.rel (0) target = $region57
    $region56: #{tpu_custom_call.1} parent=1 // pred_region
      %130 = dma.done [#allocation7], 1024
    $region57: #{tpu_custom_call.1} parent=1 // pred_fallthru
      _
    // Predicated region
    $region58: #{tpu_custom_call.1} parent=1 // pred_check
      _
    $region59: #{tpu_custom_call.1} parent=1 // pred_check_branch
      %132 = sbr.rel (0) target = $region61
    $region60: #{tpu_custom_call.1} parent=1 // pred_region
      %133 = dma.done [#allocation10], 1024
    $region61: #{tpu_custom_call.1} parent=1 // pred_fallthru
      _
    // Predicated region
    $region62: #{tpu_custom_call.1} parent=1 // pred_check
      _
    $region63: #{tpu_custom_call.1} parent=1 // pred_check_branch
      %135 = sbr.rel (0) target = $region65
    $region64: #{tpu_custom_call.1} parent=1 // pred_region
      %136 = dma.done [#allocation10], 1024
    $region65: #{tpu_custom_call.1} parent=1 // pred_fallthru
      _
    // Predicated region
    $region66: #{tpu_custom_call.1} parent=1 // pred_check
      _
    $region67: #{tpu_custom_call.1} parent=1 // pred_check_branch
      %138 = sbr.rel (0) target = $region69
    $region68: #{tpu_custom_call.1} parent=1 // pred_region
      %139 = dma.done [#allocation13], 32
    $region69: #{tpu_custom_call.1} parent=1 // pred_fallthru
      _
    // Predicated region
    $region70: #{tpu_custom_call.1} parent=1 // pred_check
      _
    $region71: #{tpu_custom_call.1} parent=1 // pred_check_branch
      %141 = sbr.rel (0) target = $region73
    $region72: #{tpu_custom_call.1} parent=1 // pred_region
      %142 = dma.done [#allocation13], 64
    $region73: #{tpu_custom_call.1} parent=1 // pred_fallthru
      _
    // Predicated region
    $region74: #{tpu_custom_call.1} parent=1 // pred_check
      _
    $region75: #{tpu_custom_call.1} parent=1 // pred_check_branch
      %144 = sbr.rel (0) target = $region77
    $region76: #{tpu_custom_call.1} parent=1 // pred_region
      %145 = dma.done [#allocation16], 64
    $region77: #{tpu_custom_call.1} parent=1 // pred_fallthru
      _
    %v147 = vlaneseq
    %v148 = vand.u32 %v147, 127
    %v149 = vadd.s32 %v148, 128
    %vm150 = vcmp.ge.s32.totalorder %v148, 192
    %vm151 = vcmp.ge.s32.totalorder %v149, 192
    %vm152 = vcmp.lt.s32.totalorder %v148, 0
    %v153 = vsub.s32 0, %v148
    %v154 = vsel %vm152, %v153, %v148
    %v155 = vshrl.u32 %v154, 6
    %v156 = vand.u32 %v154, 63
    %v157 = vsub.s32 0, %v156
    %v158 = vsel %vm152, %v157, %v156
    %vm159 = vcmp.lt.s32.totalorder %v149, 0
    %v160 = vsub.s32 0, %v149
    %v161 = vsel %vm159, %v160, %v149
    %v162 = vshrl.u32 %v161, 6
    %v163 = vand.u32 %v161, 63
    %v164 = vsub.s32 0, %v163
    %v165 = vsel %vm159, %v164, %v163
    %vm166 = vcmp.ne.s32.totalorder %v158, 0
    %vm167 = vcmp.ne.s32.totalorder %v165, 0
    %vm168 = vcmp.lt.s32.totalorder %v158, 0
    %vm169 = vcmp.lt.s32.totalorder %v165, 0
    %vm170 = vmand %vm168, %vm166
    %vm171 = vmand %vm169, %vm167
    %v172 = vadd.s32 %v158, 64
    %v173 = vadd.s32 %v165, 64
    %v174 = vsel %vm170, %v172, %v158
    %v175 = vsel %vm171, %v173, %v165
    %vm176 = vcmp.lt.s32.totalorder %v174, 32
    %vm177 = vcmp.lt.s32.totalorder %v175, 32
    %vm178 = vcmp.lt.s32.totalorder %v148, 32
    %v179 = vld [vmem:[#allocation3] sm:$0xf]
    %v180 = vld [vmem:[#allocation3 + $0x4] sm:$0xf]
    %v181 = vld [vmem:[#allocation6] sm:$0xff]
    %v182 = vld [vmem:[#allocation6 + $0x8] sm:$0xff]
    %v183 = vld [vmem:[%s3] sm:$0x3]
    %v185 = vlaneseq
    %v186 = vshrl.u32 %v185, 7
    %v187 = vsub.s32 0, %v186
    %v188 = vrot.slane %v183, %v187
    %v189 = vlaneseq
    %v190 = vshrl.u32 %v189, 7
    %v191 = vsub.s32 1, %v190
    %v192 = vrot.slane %v183, %v191
    %v197 = vunpack.c.l.b16 %v179
    %v198 = vunpack.c.l.b16 %v180
    %v199 = vpack.c.b16 %v198, %v197
    %v202 = vunpack.c.l.b16 %v181
    %v203 = vunpack.c.h.b16 %v181
    %v204 = vunpack.c.l.b16 %v182
    %v205 = vunpack.c.h.b16 %v182
    %v206 = vpack.c.b16 %v204, %v202
    %v207 = vpack.c.b16 %v205, %v203
    %vm210 = vcmask 130048
    %v212 = vsel %vm210, %v199, 0
    %214 = vmatprep.subr.bf16.mxu0 %v207
    %215 = vmatpush1.bf16.msra.mxu0 %v206
    %216 = vmatprep.subr.bf16.mxu0 0
    %217 = vmatpush1.bf16.msra.mxu0 0
    %218 = vmatprep.subr.bf16.mxu0 0
    %219 = vmatpush1.bf16.msra.mxu0 0
    %220 = vmatprep.subr.bf16.mxu0 0
    %221 = vmatpush1.bf16.msra.mxu0 0
    %222 = vmatprep.subr.bf16.mxu0 0
    %223 = vmatpush1.bf16.msra.mxu0 0
    %224 = vmatprep.subr.bf16.mxu0 0
    %225 = vmatpush1.bf16.msra.mxu0 0
    %226 = vmatprep.subr.bf16.mxu0 0
    %227 = vmatpush1.bf16.msra.mxu0 0
    %228 = vmatprep.subr.bf16.mxu0 0
    %229 = vmatpush1.bf16.msra.mxu0 0
    %230 = vmatprep.subr.bf16.mxu0 0
    %231 = vmatpush1.bf16.msra.mxu0 0
    %232 = vmatprep.subr.bf16.mxu0 0
    %233 = vmatpush1.bf16.msra.mxu0 0
    %234 = vmatprep.subr.bf16.mxu0 0
    %235 = vmatpush1.bf16.msra.mxu0 0
    %236 = vmatprep.subr.bf16.mxu0 0
    %237 = vmatpush1.bf16.msra.mxu0 0
    %238 = vmatprep.subr.bf16.mxu0 0
    %239 = vmatpush1.bf16.msra.mxu0 0
    %240 = vmatprep.subr.bf16.mxu0 0
    %241 = vmatpush1.bf16.msra.mxu0 0
    %242 = vmatprep.subr.bf16.mxu0 0
    %243 = vmatpush1.bf16.msra.mxu0 0
    %244 = vmatprep.subr.bf16.mxu0 0
    %245 = vmatpush1.bf16.msra.mxu0 0
    %246 = vmatprep.mubr.bf16.mxu0 0
    %247 = vmatmul.mubr.bf16.gmra.mrb[0].mxu0 %v212
    %v248 = vpop.f32.mrb[0].mxu0
    %v249 = vadd.f32 %v188, %v248
    %v250 = vpop.f32.mrb[0].mxu0
    %v251 = vadd.f32 %v192, %v250
    %v252 = vpop.f32.mrb[0].mxu0
    %v253 = vadd.f32 %v188, %v252
    %v254 = vpop.f32.mrb[0].mxu0
    %v255 = vadd.f32 %v192, %v254
    %256 = vdwg.mxu0
    %v259 = vrot.slane %v253, 6
    %v260 = vrot.slane %v255, 6
    %v263 = vsel %vm176, %v249, %v259
    %v264 = vsel %vm177, %v251, %v260
    %v265 = vrot.slane %v253, 2
    %v266 = vrot.slane %v255, 2
    %v269 = vsel %vm176, %v249, %v265
    %v270 = vsel %vm177, %v251, %v266
    %v273 = vrot.slane %v249, 6
    %v274 = vrot.slane %v251, 6
    %v277 = vsel %vm176, %v253, %v273
    %v278 = vsel %vm177, %v255, %v274
    %v279 = vrot.slane %v249, 2
    %v280 = vrot.slane %v251, 2
    %v283 = vsel %vm176, %v253, %v279
    %v284 = vsel %vm177, %v255, %v280
    %v285 = vld [vmem:[#allocation8] sm:$0xff]
    %v286 = vld [vmem:[#allocation8 + $0x8] sm:$0xff]
    %v287 = vld [vmem:[#allocation8 + $0x10] sm:$0xff]
    %v288 = vld [vmem:[#allocation8 + $0x18] sm:$0xff]
    %v289 = vld [vmem:[#allocation8 + $0x20] sm:$0xff]
    %v290 = vld [vmem:[#allocation8 + $0x28] sm:$0xff]
    %v291 = vld [vmem:[#allocation8 + $0x30] sm:$0xff]
    %v292 = vld [vmem:[#allocation8 + $0x38] sm:$0xff]
    %v293 = vld [vmem:[#allocation14] sm:$0x3]
    %v294 = vld [vmem:[#allocation15] sm:$0x3]
    %v295 = vpack.c.bf16 %v293, %v293
    %v304 = vunpack.c.l.b16 %v285
    %v305 = vunpack.c.h.b16 %v285
    %v306 = vunpack.c.l.b16 %v286
    %v307 = vunpack.c.h.b16 %v286
    %v308 = vunpack.c.l.b16 %v287
    %v309 = vunpack.c.h.b16 %v287
    %v310 = vunpack.c.l.b16 %v288
    %v311 = vunpack.c.h.b16 %v288
    %v312 = vunpack.c.l.b16 %v289
    %v313 = vunpack.c.h.b16 %v289
    %v314 = vunpack.c.l.b16 %v290
    %v315 = vunpack.c.h.b16 %v290
    %v316 = vunpack.c.l.b16 %v291
    %v317 = vunpack.c.h.b16 %v291
    %v318 = vunpack.c.l.b16 %v292
    %v319 = vunpack.c.h.b16 %v292
    %v320 = vpack.c.b16 %v306, %v304
    %v321 = vpack.c.b16 %v307, %v305
    %v322 = vpack.c.b16 %v310, %v308
    %v323 = vpack.c.b16 %v311, %v309
    %v324 = vpack.c.b16 %v314, %v312
    %v325 = vpack.c.b16 %v315, %v313
    %v326 = vpack.c.b16 %v318, %v316
    %v327 = vpack.c.b16 %v319, %v317
    %vm336 = vcmask 523264
    %v338 = vsel %vm336, %v295, 0
    %340 = vmatprep.subr.bf16.mxu0 %v321
    %341 = vmatpush1.bf16.msra.mxu0 %v320
    %342 = vmatprep.subr.bf16.mxu0 %v323
    %343 = vmatpush1.bf16.msra.mxu0 %v322
    %344 = vmatprep.subr.bf16.mxu0 %v325
    %345 = vmatpush1.bf16.msra.mxu0 %v324
    %346 = vmatprep.subr.bf16.mxu0 %v327
    %347 = vmatpush1.bf16.msra.mxu0 %v326
    %348 = vmatprep.subr.bf16.mxu0 0
    %349 = vmatpush1.bf16.msra.mxu0 0
    %350 = vmatprep.subr.bf16.mxu0 0
    %351 = vmatpush1.bf16.msra.mxu0 0
    %352 = vmatprep.subr.bf16.mxu0 0
    %353 = vmatpush1.bf16.msra.mxu0 0
    %354 = vmatprep.subr.bf16.mxu0 0
    %355 = vmatpush1.bf16.msra.mxu0 0
    %356 = vmatprep.subr.bf16.mxu0 0
    %357 = vmatpush1.bf16.msra.mxu0 0
    %358 = vmatprep.subr.bf16.mxu0 0
    %359 = vmatpush1.bf16.msra.mxu0 0
    %360 = vmatprep.subr.bf16.mxu0 0
    %361 = vmatpush1.bf16.msra.mxu0 0
    %362 = vmatprep.subr.bf16.mxu0 0
    %363 = vmatpush1.bf16.msra.mxu0 0
    %364 = vmatprep.subr.bf16.mxu0 0
    %365 = vmatpush1.bf16.msra.mxu0 0
    %366 = vmatprep.subr.bf16.mxu0 0
    %367 = vmatpush1.bf16.msra.mxu0 0
    %368 = vmatprep.subr.bf16.mxu0 0
    %369 = vmatpush1.bf16.msra.mxu0 0
    %370 = vmatprep.subr.bf16.mxu0 0
    %371 = vmatpush1.bf16.msra.mxu0 0
    %372 = vmatprep.mubr.bf16.mxu0 0
    %373 = vmatmul.mubr.bf16.gmra.mrb[0].mxu0 %v338
    %v374 = vpop.f32.mrb[0].mxu0
    %v375 = vadd.f32 0.0, %v374
    %v376 = vpop.f32.mrb[0].mxu0
    %v377 = vadd.f32 0.0, %v376
    %v378 = vpop.f32.mrb[0].mxu0
    %v379 = vpop.f32.mrb[0].mxu0
    %380 = vdwg.mxu0
    %v381 = vadd.f32 %v263, %v375
    %v382 = vadd.f32 %v264, %v377
    %v383 = vtanh.pop %v381
    %v384 = vtanh.pop %v382
    %v385 = vxor.u32 %v381, 2147483648
    %v386 = vxor.u32 %v382, 2147483648
    %v387 = vmul.f32 %v385, 1.442695
    %v388 = vpow.pop %v387
    %v389 = vmul.f32 %v386, 1.442695
    %v390 = vpow.pop %v389
    %v391 = vadd.f32 %v388, 1.0
    %v392 = vadd.f32 %v390, 1.0
    %v393 = vrcp.pop %v391
    %v394 = vmul.f32 1.0, %v393
    %v395 = vrcp.pop %v392
    %v396 = vmul.f32 1.0, %v395
    %v397 = vsel %vm150, %v383, %v394
    %v398 = vsel %vm151, %v384, %v396
    %400 = vrot.lane.b32.xlu0 %v294, 64
    %v401 = vpop.permute.xlu0 %400
    %v403 = vmul.f32 %v397, %v401
    %405 = vrot.lane.b32.xlu0 %v398, 64
    %v406 = vpop.permute.xlu0 %405
    %v408 = vmul.f32 %v397, %v406
    %410 = vrot.lane.b32.xlu0 %v408, 64
    %v411 = vpop.permute.xlu0 %410
    %v413 = vadd.f32 %v403, %v411
    %v414 = vtanh.pop %v413
    %416 = vrot.lane.b32.xlu0 %v414, 64
    %v417 = vpop.permute.xlu0 %416
    %v419 = vmul.f32 %v398, %v417
    %vm420 = vcmask 254976
    %421 = vst.msk [vmem:[#allocation2] sm:$0x3] %vm420, %v419
    %vm422 = vcmask 517376
    %423 = vst.msk [vmem:[#allocation2 + $0xe] sm:$0x3] %vm422, %v419
    %v424 = vpack.c.bf16 %v419, %v419
    %v426 = vsel %vm336, %v424, 0
    %428 = vmatprep.subr.bf16.mxu0 %v321
    %429 = vmatpush1.bf16.msra.mxu0 %v320
    %430 = vmatprep.subr.bf16.mxu0 %v323
    %431 = vmatpush1.bf16.msra.mxu0 %v322
    %432 = vmatprep.subr.bf16.mxu0 %v325
    %433 = vmatpush1.bf16.msra.mxu0 %v324
    %434 = vmatprep.subr.bf16.mxu0 %v327
    %435 = vmatpush1.bf16.msra.mxu0 %v326
    %436 = vmatprep.subr.bf16.mxu0 0
    %437 = vmatpush1.bf16.msra.mxu0 0
    %438 = vmatprep.subr.bf16.mxu0 0
    %439 = vmatpush1.bf16.msra.mxu0 0
    %440 = vmatprep.subr.bf16.mxu0 0
    %441 = vmatpush1.bf16.msra.mxu0 0
    %442 = vmatprep.subr.bf16.mxu0 0
    %443 = vmatpush1.bf16.msra.mxu0 0
    %444 = vmatprep.subr.bf16.mxu0 0
    %445 = vmatpush1.bf16.msra.mxu0 0
    %446 = vmatprep.subr.bf16.mxu0 0
    %447 = vmatpush1.bf16.msra.mxu0 0
    %448 = vmatprep.subr.bf16.mxu0 0
    %449 = vmatpush1.bf16.msra.mxu0 0
    %450 = vmatprep.subr.bf16.mxu0 0
    %451 = vmatpush1.bf16.msra.mxu0 0
    %452 = vmatprep.subr.bf16.mxu0 0
    %453 = vmatpush1.bf16.msra.mxu0 0
    %454 = vmatprep.subr.bf16.mxu0 0
    %455 = vmatpush1.bf16.msra.mxu0 0
    %456 = vmatprep.subr.bf16.mxu0 0
    %457 = vmatpush1.bf16.msra.mxu0 0
    %458 = vmatprep.subr.bf16.mxu0 0
    %459 = vmatpush1.bf16.msra.mxu0 0
    %460 = vmatprep.mubr.bf16.mxu0 0
    %461 = vmatmul.mubr.bf16.gmra.mrb[0].mxu0 %v426
    %v462 = vpop.f32.mrb[0].mxu0
    %v463 = vadd.f32 0.0, %v462
    %v464 = vpop.f32.mrb[0].mxu0
    %v465 = vadd.f32 0.0, %v464
    %v466 = vpop.f32.mrb[0].mxu0
    %v467 = vpop.f32.mrb[0].mxu0
    %468 = vdwg.mxu0
    %v471 = vrot.slane %v463, 6
    %v472 = vrot.slane %v465, 6
    %v475 = vadd.f32 %v269, %v471
    %v476 = vadd.f32 %v270, %v472
    %v477 = vtanh.pop %v475
    %v478 = vtanh.pop %v476
    %v479 = vxor.u32 %v475, 2147483648
    %v480 = vxor.u32 %v476, 2147483648
    %v481 = vmul.f32 %v479, 1.442695
    %v482 = vpow.pop %v481
    %v483 = vmul.f32 %v480, 1.442695
    %v484 = vpow.pop %v483
    %v485 = vadd.f32 %v482, 1.0
    %v486 = vadd.f32 %v484, 1.0
    %v487 = vrcp.pop %v485
    %v488 = vmul.f32 1.0, %v487
    %v489 = vrcp.pop %v486
    %v490 = vmul.f32 1.0, %v489
    %v491 = vsel %vm150, %v477, %v488
    %v492 = vsel %vm151, %v478, %v490
    %v494 = vrot.slane %v413, 6
    %v496 = vmul.f32 %v491, %v494
    %498 = vrot.lane.b32.xlu0 %v492, 64
    %v499 = vpop.permute.xlu0 %498
    %v501 = vmul.f32 %v491, %v499
    %503 = vrot.lane.b32.xlu0 %v501, 64
    %v504 = vpop.permute.xlu0 %503
    %v506 = vadd.f32 %v496, %v504
    %v507 = vtanh.pop %v506
    %509 = vrot.lane.b32.xlu0 %v507, 64
    %v510 = vpop.permute.xlu0 %509
    %v512 = vmul.f32 %v492, %v510
    %vm513 = vcmask 257026
    %514 = vst.msk [vmem:[#allocation2] sm:$0xc] %vm513, %v512
    %vm515 = vcmask 519426
    %516 = vst.msk [vmem:[#allocation2 + $0xa] sm:$0xc] %vm515, %v512
    %v517 = vpack.c.bf16 %v512, %v512
    %v519 = vrot.slane %v517, 1
    %v521 = vsel %vm336, %v519, 0
    %523 = vmatprep.subr.bf16.mxu0 %v321
    %524 = vmatpush1.bf16.msra.mxu0 %v320
    %525 = vmatprep.subr.bf16.mxu0 %v323
    %526 = vmatpush1.bf16.msra.mxu0 %v322
    %527 = vmatprep.subr.bf16.mxu0 %v325
    %528 = vmatpush1.bf16.msra.mxu0 %v324
    %529 = vmatprep.subr.bf16.mxu0 %v327
    %530 = vmatpush1.bf16.msra.mxu0 %v326
    %531 = vmatprep.subr.bf16.mxu0 0
    %532 = vmatpush1.bf16.msra.mxu0 0
    %533 = vmatprep.subr.bf16.mxu0 0
    %534 = vmatpush1.bf16.msra.mxu0 0
    %535 = vmatprep.subr.bf16.mxu0 0
    %536 = vmatpush1.bf16.msra.mxu0 0
    %537 = vmatprep.subr.bf16.mxu0 0
    %538 = vmatpush1.bf16.msra.mxu0 0
    %539 = vmatprep.subr.bf16.mxu0 0
    %540 = vmatpush1.bf16.msra.mxu0 0
    %541 = vmatprep.subr.bf16.mxu0 0
    %542 = vmatpush1.bf16.msra.mxu0 0
    %543 = vmatprep.subr.bf16.mxu0 0
    %544 = vmatpush1.bf16.msra.mxu0 0
    %545 = vmatprep.subr.bf16.mxu0 0
    %546 = vmatpush1.bf16.msra.mxu0 0
    %547 = vmatprep.subr.bf16.mxu0 0
    %548 = vmatpush1.bf16.msra.mxu0 0
    %549 = vmatprep.subr.bf16.mxu0 0
    %550 = vmatpush1.bf16.msra.mxu0 0
    %551 = vmatprep.subr.bf16.mxu0 0
    %552 = vmatpush1.bf16.msra.mxu0 0
    %553 = vmatprep.subr.bf16.mxu0 0
    %554 = vmatpush1.bf16.msra.mxu0 0
    %555 = vmatprep.mubr.bf16.mxu0 0
    %556 = vmatmul.mubr.bf16.gmra.mrb[0].mxu0 %v521
    %v557 = vpop.f32.mrb[0].mxu0
    %v558 = vadd.f32 0.0, %v557
    %v559 = vpop.f32.mrb[0].mxu0
    %v560 = vadd.f32 0.0, %v559
    %v561 = vpop.f32.mrb[0].mxu0
    %v562 = vpop.f32.mrb[0].mxu0
    %563 = vdwg.mxu0
    %v566 = vrot.slane %v558, 4
    %v567 = vrot.slane %v560, 4
    %v570 = vadd.f32 %v263, %v566
    %v571 = vadd.f32 %v264, %v567
    %v572 = vtanh.pop %v570
    %v573 = vtanh.pop %v571
    %v574 = vxor.u32 %v570, 2147483648
    %v575 = vxor.u32 %v571, 2147483648
    %v576 = vmul.f32 %v574, 1.442695
    %v577 = vpow.pop %v576
    %v578 = vmul.f32 %v575, 1.442695
    %v579 = vpow.pop %v578
    %v580 = vadd.f32 %v577, 1.0
    %v581 = vadd.f32 %v579, 1.0
    %v582 = vrcp.pop %v580
    %v583 = vmul.f32 1.0, %v582
    %v584 = vrcp.pop %v581
    %v585 = vmul.f32 1.0, %v584
    %v586 = vsel %vm150, %v572, %v583
    %v587 = vsel %vm151, %v573, %v585
    %v589 = vrot.slane %v506, 6
    %v591 = vmul.f32 %v586, %v589
    %593 = vrot.lane.b32.xlu0 %v587, 64
    %v594 = vpop.permute.xlu0 %593
    %v596 = vmul.f32 %v586, %v594
    %598 = vrot.lane.b32.xlu0 %v596, 64
    %v599 = vpop.permute.xlu0 %598
    %v601 = vadd.f32 %v591, %v599
    %v602 = vtanh.pop %v601
    %604 = vrot.lane.b32.xlu0 %v602, 64
    %v605 = vpop.permute.xlu0 %604
    %v607 = vmul.f32 %v587, %v605
    %vm608 = vcmask 259076
    %609 = vst.msk [vmem:[#allocation2] sm:$0x30] %vm608, %v607
    %vm610 = vcmask 521476
    %611 = vst.msk [vmem:[#allocation2 + $0x6] sm:$0x30] %vm610, %v607
    %v612 = vpack.c.bf16 %v607, %v607
    %v614 = vrot.slane %v612, 2
    %v616 = vsel %vm336, %v614, 0
    %618 = vmatprep.subr.bf16.mxu0 %v321
    %619 = vmatpush1.bf16.msra.mxu0 %v320
    %620 = vmatprep.subr.bf16.mxu0 %v323
    %621 = vmatpush1.bf16.msra.mxu0 %v322
    %622 = vmatprep.subr.bf16.mxu0 %v325
    %623 = vmatpush1.bf16.msra.mxu0 %v324
    %624 = vmatprep.subr.bf16.mxu0 %v327
    %625 = vmatpush1.bf16.msra.mxu0 %v326
    %626 = vmatprep.subr.bf16.mxu0 0
    %627 = vmatpush1.bf16.msra.mxu0 0
    %628 = vmatprep.subr.bf16.mxu0 0
    %629 = vmatpush1.bf16.msra.mxu0 0
    %630 = vmatprep.subr.bf16.mxu0 0
    %631 = vmatpush1.bf16.msra.mxu0 0
    %632 = vmatprep.subr.bf16.mxu0 0
    %633 = vmatpush1.bf16.msra.mxu0 0
    %634 = vmatprep.subr.bf16.mxu0 0
    %635 = vmatpush1.bf16.msra.mxu0 0
    %636 = vmatprep.subr.bf16.mxu0 0
    %637 = vmatpush1.bf16.msra.mxu0 0
    %638 = vmatprep.subr.bf16.mxu0 0
    %639 = vmatpush1.bf16.msra.mxu0 0
    %640 = vmatprep.subr.bf16.mxu0 0
    %641 = vmatpush1.bf16.msra.mxu0 0
    %642 = vmatprep.subr.bf16.mxu0 0
    %643 = vmatpush1.bf16.msra.mxu0 0
    %644 = vmatprep.subr.bf16.mxu0 0
    %645 = vmatpush1.bf16.msra.mxu0 0
    %646 = vmatprep.subr.bf16.mxu0 0
    %647 = vmatpush1.bf16.msra.mxu0 0
    %648 = vmatprep.subr.bf16.mxu0 0
    %649 = vmatpush1.bf16.msra.mxu0 0
    %650 = vmatprep.mubr.bf16.mxu0 0
    %651 = vmatmul.mubr.bf16.gmra.mrb[0].mxu0 %v616
    %v652 = vpop.f32.mrb[0].mxu0
    %v653 = vadd.f32 0.0, %v652
    %v654 = vpop.f32.mrb[0].mxu0
    %v655 = vadd.f32 0.0, %v654
    %v656 = vpop.f32.mrb[0].mxu0
    %v657 = vpop.f32.mrb[0].mxu0
    %658 = vdwg.mxu0
    %v661 = vrot.slane %v653, 2
    %v662 = vrot.slane %v655, 2
    %v665 = vadd.f32 %v269, %v661
    %v666 = vadd.f32 %v270, %v662
    %v667 = vtanh.pop %v665
    %v668 = vtanh.pop %v666
    %v669 = vxor.u32 %v665, 2147483648
    %v670 = vxor.u32 %v666, 2147483648
    %v671 = vmul.f32 %v669, 1.442695
    %v672 = vpow.pop %v671
    %v673 = vmul.f32 %v670, 1.442695
    %v674 = vpow.pop %v673
    %v675 = vadd.f32 %v672, 1.0
    %v676 = vadd.f32 %v674, 1.0
    %v677 = vrcp.pop %v675
    %v678 = vmul.f32 1.0, %v677
    %v679 = vrcp.pop %v676
    %v680 = vmul.f32 1.0, %v679
    %v681 = vsel %vm150, %v667, %v678
    %v682 = vsel %vm151, %v668, %v680
    %v684 = vrot.slane %v601, 6
    %v686 = vmul.f32 %v681, %v684
    %688 = vrot.lane.b32.xlu0 %v682, 64
    %v689 = vpop.permute.xlu0 %688
    %v691 = vmul.f32 %v681, %v689
    %693 = vrot.lane.b32.xlu0 %v691, 64
    %v694 = vpop.permute.xlu0 %693
    %v696 = vadd.f32 %v686, %v694
    %v697 = vtanh.pop %v696
    %699 = vrot.lane.b32.xlu0 %v697, 64
    %v700 = vpop.permute.xlu0 %699
    %v702 = vmul.f32 %v682, %v700
    %vm703 = vcmask 261126
    %704 = vst.msk [vmem:[#allocation2] sm:$0xc0] %vm703, %v702
    %vm705 = vcmask 523526
    %706 = vst.msk [vmem:[#allocation2 + $0x2] sm:$0xc0] %vm705, %v702
    %v707 = vpack.c.bf16 %v702, %v702
    %v709 = vrot.slane %v707, 3
    %v711 = vsel %vm336, %v709, 0
    %713 = vmatprep.subr.bf16.mxu0 %v321
    %714 = vmatpush1.bf16.msra.mxu0 %v320
    %715 = vmatprep.subr.bf16.mxu0 %v323
    %716 = vmatpush1.bf16.msra.mxu0 %v322
    %717 = vmatprep.subr.bf16.mxu0 %v325
    %718 = vmatpush1.bf16.msra.mxu0 %v324
    %719 = vmatprep.subr.bf16.mxu0 %v327
    %720 = vmatpush1.bf16.msra.mxu0 %v326
    %721 = vmatprep.subr.bf16.mxu0 0
    %722 = vmatpush1.bf16.msra.mxu0 0
    %723 = vmatprep.subr.bf16.mxu0 0
    %724 = vmatpush1.bf16.msra.mxu0 0
    %725 = vmatprep.subr.bf16.mxu0 0
    %726 = vmatpush1.bf16.msra.mxu0 0
    %727 = vmatprep.subr.bf16.mxu0 0
    %728 = vmatpush1.bf16.msra.mxu0 0
    %729 = vmatprep.subr.bf16.mxu0 0
    %730 = vmatpush1.bf16.msra.mxu0 0
    %731 = vmatprep.subr.bf16.mxu0 0
    %732 = vmatpush1.bf16.msra.mxu0 0
    %733 = vmatprep.subr.bf16.mxu0 0
    %734 = vmatpush1.bf16.msra.mxu0 0
    %735 = vmatprep.subr.bf16.mxu0 0
    %736 = vmatpush1.bf16.msra.mxu0 0
    %737 = vmatprep.subr.bf16.mxu0 0
    %738 = vmatpush1.bf16.msra.mxu0 0
    %739 = vmatprep.subr.bf16.mxu0 0
    %740 = vmatpush1.bf16.msra.mxu0 0
    %741 = vmatprep.subr.bf16.mxu0 0
    %742 = vmatpush1.bf16.msra.mxu0 0
    %743 = vmatprep.subr.bf16.mxu0 0
    %744 = vmatpush1.bf16.msra.mxu0 0
    %745 = vmatprep.mubr.bf16.mxu0 0
    %746 = vmatmul.mubr.bf16.gmra.mrb[0].mxu0 %v711
    %v747 = vpop.f32.mrb[0].mxu0
    %v748 = vadd.f32 0.0, %v747
    %v749 = vpop.f32.mrb[0].mxu0
    %v750 = vadd.f32 0.0, %v749
    %v751 = vpop.f32.mrb[0].mxu0
    %v752 = vpop.f32.mrb[0].mxu0
    %753 = vdwg.mxu0
    %v754 = vadd.f32 %v277, %v748
    %v755 = vadd.f32 %v278, %v750
    %v756 = vtanh.pop %v754
    %v757 = vtanh.pop %v755
    %v758 = vxor.u32 %v754, 2147483648
    %v759 = vxor.u32 %v755, 2147483648
    %v760 = vmul.f32 %v758, 1.442695
    %v761 = vpow.pop %v760
    %v762 = vmul.f32 %v759, 1.442695
    %v763 = vpow.pop %v762
    %v764 = vadd.f32 %v761, 1.0
    %v765 = vadd.f32 %v763, 1.0
    %v766 = vrcp.pop %v764
    %v767 = vmul.f32 1.0, %v766
    %v768 = vrcp.pop %v765
    %v769 = vmul.f32 1.0, %v768
    %v770 = vsel %vm150, %v756, %v767
    %v771 = vsel %vm151, %v757, %v769
    %v773 = vrot.slane %v696, 6
    %v775 = vmul.f32 %v770, %v773
    %777 = vrot.lane.b32.xlu0 %v771, 64
    %v778 = vpop.permute.xlu0 %777
    %v780 = vmul.f32 %v770, %v778
    %782 = vrot.lane.b32.xlu0 %v780, 64
    %v783 = vpop.permute.xlu0 %782
    %v785 = vadd.f32 %v775, %v783
    %v786 = vtanh.pop %v785
    %788 = vrot.lane.b32.xlu0 %v786, 64
    %v789 = vpop.permute.xlu0 %788
    %v791 = vmul.f32 %v771, %v789
    %792 = vst.msk [vmem:[#allocation2 + $0x8] sm:$0x3] %vm420, %v791
    %793 = vst.msk [vmem:[#allocation2 + $0x6] sm:$0x3] %vm422, %v791
    %v794 = vpack.c.bf16 %v791, %v791
    %v796 = vsel %vm336, %v794, 0
    %798 = vmatprep.subr.bf16.mxu0 %v321
    %799 = vmatpush1.bf16.msra.mxu0 %v320
    %800 = vmatprep.subr.bf16.mxu0 %v323
    %801 = vmatpush1.bf16.msra.mxu0 %v322
    %802 = vmatprep.subr.bf16.mxu0 %v325
    %803 = vmatpush1.bf16.msra.mxu0 %v324
    %804 = vmatprep.subr.bf16.mxu0 %v327
    %805 = vmatpush1.bf16.msra.mxu0 %v326
    %806 = vmatprep.subr.bf16.mxu0 0
    %807 = vmatpush1.bf16.msra.mxu0 0
    %808 = vmatprep.subr.bf16.mxu0 0
    %809 = vmatpush1.bf16.msra.mxu0 0
    %810 = vmatprep.subr.bf16.mxu0 0
    %811 = vmatpush1.bf16.msra.mxu0 0
    %812 = vmatprep.subr.bf16.mxu0 0
    %813 = vmatpush1.bf16.msra.mxu0 0
    %814 = vmatprep.subr.bf16.mxu0 0
    %815 = vmatpush1.bf16.msra.mxu0 0
    %816 = vmatprep.subr.bf16.mxu0 0
    %817 = vmatpush1.bf16.msra.mxu0 0
    %818 = vmatprep.subr.bf16.mxu0 0
    %819 = vmatpush1.bf16.msra.mxu0 0
    %820 = vmatprep.subr.bf16.mxu0 0
    %821 = vmatpush1.bf16.msra.mxu0 0
    %822 = vmatprep.subr.bf16.mxu0 0
    %823 = vmatpush1.bf16.msra.mxu0 0
    %824 = vmatprep.subr.bf16.mxu0 0
    %825 = vmatpush1.bf16.msra.mxu0 0
    %826 = vmatprep.subr.bf16.mxu0 0
    %827 = vmatpush1.bf16.msra.mxu0 0
    %828 = vmatprep.subr.bf16.mxu0 0
    %829 = vmatpush1.bf16.msra.mxu0 0
    %830 = vmatprep.mubr.bf16.mxu0 0
    %831 = vmatmul.mubr.bf16.gmra.mrb[0].mxu0 %v796
    %v832 = vpop.f32.mrb[0].mxu0
    %v833 = vadd.f32 0.0, %v832
    %v834 = vpop.f32.mrb[0].mxu0
    %v835 = vadd.f32 0.0, %v834
    %v836 = vpop.f32.mrb[0].mxu0
    %v837 = vpop.f32.mrb[0].mxu0
    %838 = vdwg.mxu0
    %v841 = vrot.slane %v833, 6
    %v842 = vrot.slane %v835, 6
    %v845 = vadd.f32 %v283, %v841
    %v846 = vadd.f32 %v284, %v842
    %v847 = vtanh.pop %v845
    %v848 = vtanh.pop %v846
    %v849 = vxor.u32 %v845, 2147483648
    %v850 = vxor.u32 %v846, 2147483648
    %v851 = vmul.f32 %v849, 1.442695
    %v852 = vpow.pop %v851
    %v853 = vmul.f32 %v850, 1.442695
    %v854 = vpow.pop %v853
    %v855 = vadd.f32 %v852, 1.0
    %v856 = vadd.f32 %v854, 1.0
    %v857 = vrcp.pop %v855
    %v858 = vmul.f32 1.0, %v857
    %v859 = vrcp.pop %v856
    %v860 = vmul.f32 1.0, %v859
    %v861 = vsel %vm150, %v847, %v858
    %v862 = vsel %vm151, %v848, %v860
    %v864 = vrot.slane %v785, 6
    %v866 = vmul.f32 %v861, %v864
    %868 = vrot.lane.b32.xlu0 %v862, 64
    %v869 = vpop.permute.xlu0 %868
    %v871 = vmul.f32 %v861, %v869
    %873 = vrot.lane.b32.xlu0 %v871, 64
    %v874 = vpop.permute.xlu0 %873
    %v876 = vadd.f32 %v866, %v874
    %v877 = vtanh.pop %v876
    %879 = vrot.lane.b32.xlu0 %v877, 64
    %v880 = vpop.permute.xlu0 %879
    %v882 = vmul.f32 %v862, %v880
    %883 = vst.msk [vmem:[#allocation2 + $0x8] sm:$0xc] %vm513, %v882
    %884 = vst.msk [vmem:[#allocation2 + $0x2] sm:$0xc] %vm515, %v882
    %v885 = vpack.c.bf16 %v882, %v882
    %v887 = vrot.slane %v885, 1
    %v889 = vsel %vm336, %v887, 0
    %891 = vmatprep.subr.bf16.mxu0 %v321
    %892 = vmatpush1.bf16.msra.mxu0 %v320
    %893 = vmatprep.subr.bf16.mxu0 %v323
    %894 = vmatpush1.bf16.msra.mxu0 %v322
    %895 = vmatprep.subr.bf16.mxu0 %v325
    %896 = vmatpush1.bf16.msra.mxu0 %v324
    %897 = vmatprep.subr.bf16.mxu0 %v327
    %898 = vmatpush1.bf16.msra.mxu0 %v326
    %899 = vmatprep.subr.bf16.mxu0 0
    %900 = vmatpush1.bf16.msra.mxu0 0
    %901 = vmatprep.subr.bf16.mxu0 0
    %902 = vmatpush1.bf16.msra.mxu0 0
    %903 = vmatprep.subr.bf16.mxu0 0
    %904 = vmatpush1.bf16.msra.mxu0 0
    %905 = vmatprep.subr.bf16.mxu0 0
    %906 = vmatpush1.bf16.msra.mxu0 0
    %907 = vmatprep.subr.bf16.mxu0 0
    %908 = vmatpush1.bf16.msra.mxu0 0
    %909 = vmatprep.subr.bf16.mxu0 0
    %910 = vmatpush1.bf16.msra.mxu0 0
    %911 = vmatprep.subr.bf16.mxu0 0
    %912 = vmatpush1.bf16.msra.mxu0 0
    %913 = vmatprep.subr.bf16.mxu0 0
    %914 = vmatpush1.bf16.msra.mxu0 0
    %915 = vmatprep.subr.bf16.mxu0 0
    %916 = vmatpush1.bf16.msra.mxu0 0
    %917 = vmatprep.subr.bf16.mxu0 0
    %918 = vmatpush1.bf16.msra.mxu0 0
    %919 = vmatprep.subr.bf16.mxu0 0
    %920 = vmatpush1.bf16.msra.mxu0 0
    %921 = vmatprep.subr.bf16.mxu0 0
    %922 = vmatpush1.bf16.msra.mxu0 0
    %923 = vmatprep.mubr.bf16.mxu0 0
    %924 = vmatmul.mubr.bf16.gmra.mrb[0].mxu0 %v889
    %v925 = vpop.f32.mrb[0].mxu0
    %v926 = vadd.f32 0.0, %v925
    %v927 = vpop.f32.mrb[0].mxu0
    %v928 = vadd.f32 0.0, %v927
    %v929 = vpop.f32.mrb[0].mxu0
    %v930 = vpop.f32.mrb[0].mxu0
    %931 = vdwg.mxu0
    %v934 = vrot.slane %v926, 4
    %v935 = vrot.slane %v928, 4
    %v938 = vadd.f32 %v277, %v934
    %v939 = vadd.f32 %v278, %v935
    %v940 = vtanh.pop %v938
    %v941 = vtanh.pop %v939
    %v942 = vxor.u32 %v938, 2147483648
    %v943 = vxor.u32 %v939, 2147483648
    %v944 = vmul.f32 %v942, 1.442695
    %v945 = vpow.pop %v944
    %v946 = vmul.f32 %v943, 1.442695
    %v947 = vpow.pop %v946
    %v948 = vadd.f32 %v945, 1.0
    %v949 = vadd.f32 %v947, 1.0
    %v950 = vrcp.pop %v948
    %v951 = vmul.f32 1.0, %v950
    %v952 = vrcp.pop %v949
    %v953 = vmul.f32 1.0, %v952
    %v954 = vsel %vm150, %v940, %v951
    %v955 = vsel %vm151, %v941, %v953
    %v957 = vrot.slane %v876, 6
    %v959 = vmul.f32 %v954, %v957
    %961 = vrot.lane.b32.xlu0 %v955, 64
    %v962 = vpop.permute.xlu0 %961
    %v964 = vmul.f32 %v954, %v962
    %966 = vrot.lane.b32.xlu0 %v964, 64
    %v967 = vpop.permute.xlu0 %966
    %v969 = vadd.f32 %v959, %v967
    %v970 = vtanh.pop %v969
    %972 = vrot.lane.b32.xlu0 %v970, 64
    %v973 = vpop.permute.xlu0 %972
    %v975 = vmul.f32 %v955, %v973
    %976 = vst.msk [vmem:[#allocation2 + $0x8] sm:$0x30] %vm608, %v975
    %977 = vst.msk [vmem:[#allocation2 - $0x2] sm:$0x30] %vm610, %v975
    %v978 = vpack.c.bf16 %v975, %v975
    %v980 = vrot.slane %v978, 2
    %v982 = vsel %vm336, %v980, 0
    %984 = vmatprep.subr.bf16.mxu0 %v321
    %985 = vmatpush1.bf16.msra.mxu0 %v320
    %986 = vmatprep.subr.bf16.mxu0 %v323
    %987 = vmatpush1.bf16.msra.mxu0 %v322
    %988 = vmatprep.subr.bf16.mxu0 %v325
    %989 = vmatpush1.bf16.msra.mxu0 %v324
    %990 = vmatprep.subr.bf16.mxu0 %v327
    %991 = vmatpush1.bf16.msra.mxu0 %v326
    %992 = vmatprep.subr.bf16.mxu0 0
    %993 = vmatpush1.bf16.msra.mxu0 0
    %994 = vmatprep.subr.bf16.mxu0 0
    %995 = vmatpush1.bf16.msra.mxu0 0
    %996 = vmatprep.subr.bf16.mxu0 0
    %997 = vmatpush1.bf16.msra.mxu0 0
    %998 = vmatprep.subr.bf16.mxu0 0
    %999 = vmatpush1.bf16.msra.mxu0 0
    %1000 = vmatprep.subr.bf16.mxu0 0
    %1001 = vmatpush1.bf16.msra.mxu0 0
    %1002 = vmatprep.subr.bf16.mxu0 0
    %1003 = vmatpush1.bf16.msra.mxu0 0
    %1004 = vmatprep.subr.bf16.mxu0 0
    %1005 = vmatpush1.bf16.msra.mxu0 0
    %1006 = vmatprep.subr.bf16.mxu0 0
    %1007 = vmatpush1.bf16.msra.mxu0 0
    %1008 = vmatprep.subr.bf16.mxu0 0
    %1009 = vmatpush1.bf16.msra.mxu0 0
    %1010 = vmatprep.subr.bf16.mxu0 0
    %1011 = vmatpush1.bf16.msra.mxu0 0
    %1012 = vmatprep.subr.bf16.mxu0 0
    %1013 = vmatpush1.bf16.msra.mxu0 0
    %1014 = vmatprep.subr.bf16.mxu0 0
    %1015 = vmatpush1.bf16.msra.mxu0 0
    %1016 = vmatprep.mubr.bf16.mxu0 0
    %1017 = vmatmul.mubr.bf16.gmra.mrb[0].mxu0 %v982
    %v1018 = vpop.f32.mrb[0].mxu0
    %v1019 = vadd.f32 0.0, %v1018
    %v1020 = vpop.f32.mrb[0].mxu0
    %v1021 = vadd.f32 0.0, %v1020
    %v1022 = vpop.f32.mrb[0].mxu0
    %v1023 = vpop.f32.mrb[0].mxu0
    %1024 = vdwg.mxu0
    %v1027 = vrot.slane %v1019, 2
    %v1028 = vrot.slane %v1021, 2
    %v1031 = vadd.f32 %v283, %v1027
    %v1032 = vadd.f32 %v284, %v1028
    %v1033 = vtanh.pop %v1031
    %v1034 = vtanh.pop %v1032
    %v1035 = vxor.u32 %v1031, 2147483648
    %v1036 = vxor.u32 %v1032, 2147483648
    %v1037 = vmul.f32 %v1035, 1.442695
    %v1038 = vpow.pop %v1037
    %v1039 = vmul.f32 %v1036, 1.442695
    %v1040 = vpow.pop %v1039
    %v1041 = vadd.f32 %v1038, 1.0
    %v1042 = vadd.f32 %v1040, 1.0
    %v1043 = vrcp.pop %v1041
    %v1044 = vmul.f32 1.0, %v1043
    %v1045 = vrcp.pop %v1042
    %v1046 = vmul.f32 1.0, %v1045
    %v1047 = vsel %vm150, %v1033, %v1044
    %v1048 = vsel %vm151, %v1034, %v1046
    %v1050 = vrot.slane %v969, 6
    %v1052 = vmul.f32 %v1047, %v1050
    %1054 = vrot.lane.b32.xlu0 %v1048, 64
    %v1055 = vpop.permute.xlu0 %1054
    %v1057 = vmul.f32 %v1047, %v1055
    %1059 = vrot.lane.b32.xlu0 %v1057, 64
    %v1060 = vpop.permute.xlu0 %1059
    %v1062 = vadd.f32 %v1052, %v1060
    %v1063 = vtanh.pop %v1062
    %1065 = vrot.lane.b32.xlu0 %v1063, 64
    %v1066 = vpop.permute.xlu0 %1065
    %v1068 = vmul.f32 %v1048, %v1066
    %1069 = vst.msk [vmem:[#allocation2 + $0x8] sm:$0xc0] %vm703, %v1068
    %1070 = vst.msk [vmem:[#allocation2 - $0x6] sm:$0xc0] %vm705, %v1068
    %v1071 = vld [vmem:[#allocation2] sm:$0xff]
    %v1072 = vld [vmem:[#allocation2 + $0x8] sm:$0xff]
    %v1073 = vpack.c.bf16 %v1072, %v1071
    %v1074 = vld [vmem:[#allocation9] sm:$0xff]
    %v1075 = vld [vmem:[#allocation9 + $0x8] sm:$0xff]
    %v1076 = vld [vmem:[#allocation9 + $0x10] sm:$0xff]
    %v1077 = vld [vmem:[#allocation9 + $0x18] sm:$0xff]
    %v1078 = vld [vmem:[#allocation9 + $0x20] sm:$0xff]
    %v1079 = vld [vmem:[#allocation9 + $0x28] sm:$0xff]
    %v1080 = vld [vmem:[#allocation9 + $0x30] sm:$0xff]
    %v1081 = vld [vmem:[#allocation9 + $0x38] sm:$0xff]
    %v1082 = vld [vmem:[#allocation12] sm:$0x3]
    %v1084 = vlaneseq
    %v1085 = vshrl.u32 %v1084, 7
    %v1086 = vsub.s32 0, %v1085
    %v1087 = vrot.slane %v1082, %v1086
    %v1088 = vlaneseq
    %v1089 = vshrl.u32 %v1088, 7
    %v1090 = vsub.s32 1, %v1089
    %v1091 = vrot.slane %v1082, %v1090
    %v1102 = vunpack.c.l.b16 %v1074
    %v1103 = vunpack.c.h.b16 %v1074
    %v1104 = vunpack.c.l.b16 %v1075
    %v1105 = vunpack.c.h.b16 %v1075
    %v1106 = vunpack.c.l.b16 %v1076
    %v1107 = vunpack.c.h.b16 %v1076
    %v1108 = vunpack.c.l.b16 %v1077
    %v1109 = vunpack.c.h.b16 %v1077
    %v1110 = vunpack.c.l.b16 %v1078
    %v1111 = vunpack.c.h.b16 %v1078
    %v1112 = vunpack.c.l.b16 %v1079
    %v1113 = vunpack.c.h.b16 %v1079
    %v1114 = vunpack.c.l.b16 %v1080
    %v1115 = vunpack.c.h.b16 %v1080
    %v1116 = vunpack.c.l.b16 %v1081
    %v1117 = vunpack.c.h.b16 %v1081
    %v1118 = vpack.c.b16 %v1104, %v1102
    %v1119 = vpack.c.b16 %v1105, %v1103
    %v1120 = vpack.c.b16 %v1108, %v1106
    %v1121 = vpack.c.b16 %v1109, %v1107
    %v1122 = vpack.c.b16 %v1112, %v1110
    %v1123 = vpack.c.b16 %v1113, %v1111
    %v1124 = vpack.c.b16 %v1116, %v1114
    %v1125 = vpack.c.b16 %v1117, %v1115
    %v1135 = vsel %vm336, %v1073, 0
    %1137 = vmatprep.subr.bf16.mxu0 %v1119
    %1138 = vmatpush1.bf16.msra.mxu0 %v1118
    %1139 = vmatprep.subr.bf16.mxu0 %v1121
    %1140 = vmatpush1.bf16.msra.mxu0 %v1120
    %1141 = vmatprep.subr.bf16.mxu0 %v1123
    %1142 = vmatpush1.bf16.msra.mxu0 %v1122
    %1143 = vmatprep.subr.bf16.mxu0 %v1125
    %1144 = vmatpush1.bf16.msra.mxu0 %v1124
    %1145 = vmatprep.subr.bf16.mxu0 0
    %1146 = vmatpush1.bf16.msra.mxu0 0
    %1147 = vmatprep.subr.bf16.mxu0 0
    %1148 = vmatpush1.bf16.msra.mxu0 0
    %1149 = vmatprep.subr.bf16.mxu0 0
    %1150 = vmatpush1.bf16.msra.mxu0 0
    %1151 = vmatprep.subr.bf16.mxu0 0
    %1152 = vmatpush1.bf16.msra.mxu0 0
    %1153 = vmatprep.subr.bf16.mxu0 0
    %1154 = vmatpush1.bf16.msra.mxu0 0
    %1155 = vmatprep.subr.bf16.mxu0 0
    %1156 = vmatpush1.bf16.msra.mxu0 0
    %1157 = vmatprep.subr.bf16.mxu0 0
    %1158 = vmatpush1.bf16.msra.mxu0 0
    %1159 = vmatprep.subr.bf16.mxu0 0
    %1160 = vmatpush1.bf16.msra.mxu0 0
    %1161 = vmatprep.subr.bf16.mxu0 0
    %1162 = vmatpush1.bf16.msra.mxu0 0
    %1163 = vmatprep.subr.bf16.mxu0 0
    %1164 = vmatpush1.bf16.msra.mxu0 0
    %1165 = vmatprep.subr.bf16.mxu0 0
    %1166 = vmatpush1.bf16.msra.mxu0 0
    %1167 = vmatprep.subr.bf16.mxu0 0
    %1168 = vmatpush1.bf16.msra.mxu0 0
    %1169 = vmatprep.mubr.bf16.mxu0 0
    %1170 = vmatmul.mubr.bf16.gmra.mrb[0].mxu0 %v1135
    %v1171 = vpop.f32.mrb[0].mxu0
    %v1172 = vadd.f32 %v1087, %v1171
    %v1173 = vpop.f32.mrb[0].mxu0
    %v1174 = vadd.f32 %v1091, %v1173
    %v1175 = vpop.f32.mrb[0].mxu0
    %v1176 = vadd.f32 %v1087, %v1175
    %v1177 = vpop.f32.mrb[0].mxu0
    %v1178 = vadd.f32 %v1091, %v1177
    %1179 = vdwg.mxu0
    %v1182 = vrot.slane %v1176, 6
    %v1183 = vrot.slane %v1178, 6
    %v1186 = vsel %vm176, %v1172, %v1182
    %v1187 = vsel %vm177, %v1174, %v1183
    %v1188 = vrot.slane %v1176, 2
    %v1189 = vrot.slane %v1178, 2
    %v1192 = vsel %vm176, %v1172, %v1188
    %v1193 = vsel %vm177, %v1174, %v1189
    %v1196 = vrot.slane %v1172, 6
    %v1197 = vrot.slane %v1174, 6
    %v1200 = vsel %vm176, %v1176, %v1196
    %v1201 = vsel %vm177, %v1178, %v1197
    %v1202 = vrot.slane %v1172, 2
    %v1203 = vrot.slane %v1174, 2
    %v1206 = vsel %vm176, %v1176, %v1202
    %v1207 = vsel %vm177, %v1178, %v1203
    %v1208 = vld [vmem:[#allocation11] sm:$0xff]
    %v1209 = vld [vmem:[#allocation11 + $0x8] sm:$0xff]
    %v1210 = vld [vmem:[#allocation11 + $0x10] sm:$0xff]
    %v1211 = vld [vmem:[#allocation11 + $0x18] sm:$0xff]
    %v1212 = vld [vmem:[#allocation11 + $0x20] sm:$0xff]
    %v1213 = vld [vmem:[#allocation11 + $0x28] sm:$0xff]
    %v1214 = vld [vmem:[#allocation11 + $0x30] sm:$0xff]
    %v1215 = vld [vmem:[#allocation11 + $0x38] sm:$0xff]
    %s1216 = scalar_lea.vmem [#allocation14], 2
    %v1217 = vld [vmem:[%s1216] sm:$0x3]
    %s1218 = scalar_lea.vmem [#allocation15], 2
    %v1219 = vld [vmem:[%s1218] sm:$0x3]
    %v1220 = vpack.c.bf16 %v1217, %v1217
    %v1229 = vunpack.c.l.b16 %v1208
    %v1230 = vunpack.c.h.b16 %v1208
    %v1231 = vunpack.c.l.b16 %v1209
    %v1232 = vunpack.c.h.b16 %v1209
    %v1233 = vunpack.c.l.b16 %v1210
    %v1234 = vunpack.c.h.b16 %v1210
    %v1235 = vunpack.c.l.b16 %v1211
    %v1236 = vunpack.c.h.b16 %v1211
    %v1237 = vunpack.c.l.b16 %v1212
    %v1238 = vunpack.c.h.b16 %v1212
    %v1239 = vunpack.c.l.b16 %v1213
    %v1240 = vunpack.c.h.b16 %v1213
    %v1241 = vunpack.c.l.b16 %v1214
    %v1242 = vunpack.c.h.b16 %v1214
    %v1243 = vunpack.c.l.b16 %v1215
    %v1244 = vunpack.c.h.b16 %v1215
    %v1245 = vpack.c.b16 %v1231, %v1229
    %v1246 = vpack.c.b16 %v1232, %v1230
    %v1247 = vpack.c.b16 %v1235, %v1233
    %v1248 = vpack.c.b16 %v1236, %v1234
    %v1249 = vpack.c.b16 %v1239, %v1237
    %v1250 = vpack.c.b16 %v1240, %v1238
    %v1251 = vpack.c.b16 %v1243, %v1241
    %v1252 = vpack.c.b16 %v1244, %v1242
    %v1262 = vsel %vm336, %v1220, 0
    %1264 = vmatprep.subr.bf16.mxu0 %v1246
    %1265 = vmatpush1.bf16.msra.mxu0 %v1245
    %1266 = vmatprep.subr.bf16.mxu0 %v1248
    %1267 = vmatpush1.bf16.msra.mxu0 %v1247
    %1268 = vmatprep.subr.bf16.mxu0 %v1250
    %1269 = vmatpush1.bf16.msra.mxu0 %v1249
    %1270 = vmatprep.subr.bf16.mxu0 %v1252
    %1271 = vmatpush1.bf16.msra.mxu0 %v1251
    %1272 = vmatprep.subr.bf16.mxu0 0
    %1273 = vmatpush1.bf16.msra.mxu0 0
    %1274 = vmatprep.subr.bf16.mxu0 0
    %1275 = vmatpush1.bf16.msra.mxu0 0
    %1276 = vmatprep.subr.bf16.mxu0 0
    %1277 = vmatpush1.bf16.msra.mxu0 0
    %1278 = vmatprep.subr.bf16.mxu0 0
    %1279 = vmatpush1.bf16.msra.mxu0 0
    %1280 = vmatprep.subr.bf16.mxu0 0
    %1281 = vmatpush1.bf16.msra.mxu0 0
    %1282 = vmatprep.subr.bf16.mxu0 0
    %1283 = vmatpush1.bf16.msra.mxu0 0
    %1284 = vmatprep.subr.bf16.mxu0 0
    %1285 = vmatpush1.bf16.msra.mxu0 0
    %1286 = vmatprep.subr.bf16.mxu0 0
    %1287 = vmatpush1.bf16.msra.mxu0 0
    %1288 = vmatprep.subr.bf16.mxu0 0
    %1289 = vmatpush1.bf16.msra.mxu0 0
    %1290 = vmatprep.subr.bf16.mxu0 0
    %1291 = vmatpush1.bf16.msra.mxu0 0
    %1292 = vmatprep.subr.bf16.mxu0 0
    %1293 = vmatpush1.bf16.msra.mxu0 0
    %1294 = vmatprep.subr.bf16.mxu0 0
    %1295 = vmatpush1.bf16.msra.mxu0 0
    %1296 = vmatprep.mubr.bf16.mxu0 0
    %1297 = vmatmul.mubr.bf16.gmra.mrb[0].mxu0 %v1262
    %v1298 = vpop.f32.mrb[0].mxu0
    %v1299 = vadd.f32 0.0, %v1298
    %v1300 = vpop.f32.mrb[0].mxu0
    %v1301 = vadd.f32 0.0, %v1300
    %v1302 = vpop.f32.mrb[0].mxu0
    %v1303 = vpop.f32.mrb[0].mxu0
    %1304 = vdwg.mxu0
    %v1305 = vadd.f32 %v1186, %v1299
    %v1306 = vadd.f32 %v1187, %v1301
    %v1307 = vtanh.pop %v1305
    %v1308 = vtanh.pop %v1306
    %v1309 = vxor.u32 %v1305, 2147483648
    %v1310 = vxor.u32 %v1306, 2147483648
    %v1311 = vmul.f32 %v1309, 1.442695
    %v1312 = vpow.pop %v1311
    %v1313 = vmul.f32 %v1310, 1.442695
    %v1314 = vpow.pop %v1313
    %v1315 = vadd.f32 %v1312, 1.0
    %v1316 = vadd.f32 %v1314, 1.0
    %v1317 = vrcp.pop %v1315
    %v1318 = vmul.f32 1.0, %v1317
    %v1319 = vrcp.pop %v1316
    %v1320 = vmul.f32 1.0, %v1319
    %v1321 = vsel %vm150, %v1307, %v1318
    %v1322 = vsel %vm151, %v1308, %v1320
    %1324 = vrot.lane.b32.xlu0 %v1219, 64
    %v1325 = vpop.permute.xlu0 %1324
    %v1327 = vmul.f32 %v1321, %v1325
    %1329 = vrot.lane.b32.xlu0 %v1322, 64
    %v1330 = vpop.permute.xlu0 %1329
    %v1332 = vmul.f32 %v1321, %v1330
    %1334 = vrot.lane.b32.xlu0 %v1332, 64
    %v1335 = vpop.permute.xlu0 %1334
    %v1337 = vadd.f32 %v1327, %v1335
    %v1338 = vtanh.pop %v1337
    %1340 = vrot.lane.b32.xlu0 %v1338, 64
    %v1341 = vpop.permute.xlu0 %1340
    %v1343 = vmul.f32 %v1322, %v1341
    %v1344 = vpack.c.bf16 %v1343, %v1343
    %v1346 = vsel %vm336, %v1344, 0
    %1348 = vmatprep.subr.bf16.mxu0 %v1246
    %1349 = vmatpush1.bf16.msra.mxu0 %v1245
    %1350 = vmatprep.subr.bf16.mxu0 %v1248
    %1351 = vmatpush1.bf16.msra.mxu0 %v1247
    %1352 = vmatprep.subr.bf16.mxu0 %v1250
    %1353 = vmatpush1.bf16.msra.mxu0 %v1249
    %1354 = vmatprep.subr.bf16.mxu0 %v1252
    %1355 = vmatpush1.bf16.msra.mxu0 %v1251
    %1356 = vmatprep.subr.bf16.mxu0 0
    %1357 = vmatpush1.bf16.msra.mxu0 0
    %1358 = vmatprep.subr.bf16.mxu0 0
    %1359 = vmatpush1.bf16.msra.mxu0 0
    %1360 = vmatprep.subr.bf16.mxu0 0
    %1361 = vmatpush1.bf16.msra.mxu0 0
    %1362 = vmatprep.subr.bf16.mxu0 0
    %1363 = vmatpush1.bf16.msra.mxu0 0
    %1364 = vmatprep.subr.bf16.mxu0 0
    %1365 = vmatpush1.bf16.msra.mxu0 0
    %1366 = vmatprep.subr.bf16.mxu0 0
    %1367 = vmatpush1.bf16.msra.mxu0 0
    %1368 = vmatprep.subr.bf16.mxu0 0
    %1369 = vmatpush1.bf16.msra.mxu0 0
    %1370 = vmatprep.subr.bf16.mxu0 0
    %1371 = vmatpush1.bf16.msra.mxu0 0
    %1372 = vmatprep.subr.bf16.mxu0 0
    %1373 = vmatpush1.bf16.msra.mxu0 0
    %1374 = vmatprep.subr.bf16.mxu0 0
    %1375 = vmatpush1.bf16.msra.mxu0 0
    %1376 = vmatprep.subr.bf16.mxu0 0
    %1377 = vmatpush1.bf16.msra.mxu0 0
    %1378 = vmatprep.subr.bf16.mxu0 0
    %1379 = vmatpush1.bf16.msra.mxu0 0
    %1380 = vmatprep.mubr.bf16.mxu0 0
    %1381 = vmatmul.mubr.bf16.gmra.mrb[0].mxu0 %v1346
    %v1382 = vpop.f32.mrb[0].mxu0
    %v1383 = vadd.f32 0.0, %v1382
    %v1384 = vpop.f32.mrb[0].mxu0
    %v1385 = vadd.f32 0.0, %v1384
    %v1386 = vpop.f32.mrb[0].mxu0
    %v1387 = vpop.f32.mrb[0].mxu0
    %1388 = vdwg.mxu0
    %v1391 = vrot.slane %v1383, 6
    %v1392 = vrot.slane %v1385, 6
    %v1395 = vadd.f32 %v1192, %v1391
    %v1396 = vadd.f32 %v1193, %v1392
    %v1397 = vtanh.pop %v1395
    %v1398 = vtanh.pop %v1396
    %v1399 = vxor.u32 %v1395, 2147483648
    %v1400 = vxor.u32 %v1396, 2147483648
    %v1401 = vmul.f32 %v1399, 1.442695
    %v1402 = vpow.pop %v1401
    %v1403 = vmul.f32 %v1400, 1.442695
    %v1404 = vpow.pop %v1403
    %v1405 = vadd.f32 %v1402, 1.0
    %v1406 = vadd.f32 %v1404, 1.0
    %v1407 = vrcp.pop %v1405
    %v1408 = vmul.f32 1.0, %v1407
    %v1409 = vrcp.pop %v1406
    %v1410 = vmul.f32 1.0, %v1409
    %v1411 = vsel %vm150, %v1397, %v1408
    %v1412 = vsel %vm151, %v1398, %v1410
    %v1414 = vrot.slane %v1337, 6
    %v1416 = vmul.f32 %v1411, %v1414
    %1418 = vrot.lane.b32.xlu0 %v1412, 64
    %v1419 = vpop.permute.xlu0 %1418
    %v1421 = vmul.f32 %v1411, %v1419
    %1423 = vrot.lane.b32.xlu0 %v1421, 64
    %v1424 = vpop.permute.xlu0 %1423
    %v1426 = vadd.f32 %v1416, %v1424
    %v1427 = vtanh.pop %v1426
    %1429 = vrot.lane.b32.xlu0 %v1427, 64
    %v1430 = vpop.permute.xlu0 %1429
    %v1432 = vmul.f32 %v1412, %v1430
    %v1433 = vpack.c.bf16 %v1432, %v1432
    %v1435 = vrot.slane %v1433, 1
    %v1437 = vsel %vm336, %v1435, 0
    %1439 = vmatprep.subr.bf16.mxu0 %v1246
    %1440 = vmatpush1.bf16.msra.mxu0 %v1245
    %1441 = vmatprep.subr.bf16.mxu0 %v1248
    %1442 = vmatpush1.bf16.msra.mxu0 %v1247
    %1443 = vmatprep.subr.bf16.mxu0 %v1250
    %1444 = vmatpush1.bf16.msra.mxu0 %v1249
    %1445 = vmatprep.subr.bf16.mxu0 %v1252
    %1446 = vmatpush1.bf16.msra.mxu0 %v1251
    %1447 = vmatprep.subr.bf16.mxu0 0
    %1448 = vmatpush1.bf16.msra.mxu0 0
    %1449 = vmatprep.subr.bf16.mxu0 0
    %1450 = vmatpush1.bf16.msra.mxu0 0
    %1451 = vmatprep.subr.bf16.mxu0 0
    %1452 = vmatpush1.bf16.msra.mxu0 0
    %1453 = vmatprep.subr.bf16.mxu0 0
    %1454 = vmatpush1.bf16.msra.mxu0 0
    %1455 = vmatprep.subr.bf16.mxu0 0
    %1456 = vmatpush1.bf16.msra.mxu0 0
    %1457 = vmatprep.subr.bf16.mxu0 0
    %1458 = vmatpush1.bf16.msra.mxu0 0
    %1459 = vmatprep.subr.bf16.mxu0 0
    %1460 = vmatpush1.bf16.msra.mxu0 0
    %1461 = vmatprep.subr.bf16.mxu0 0
    %1462 = vmatpush1.bf16.msra.mxu0 0
    %1463 = vmatprep.subr.bf16.mxu0 0
    %1464 = vmatpush1.bf16.msra.mxu0 0
    %1465 = vmatprep.subr.bf16.mxu0 0
    %1466 = vmatpush1.bf16.msra.mxu0 0
    %1467 = vmatprep.subr.bf16.mxu0 0
    %1468 = vmatpush1.bf16.msra.mxu0 0
    %1469 = vmatprep.subr.bf16.mxu0 0
    %1470 = vmatpush1.bf16.msra.mxu0 0
    %1471 = vmatprep.mubr.bf16.mxu0 0
    %1472 = vmatmul.mubr.bf16.gmra.mrb[0].mxu0 %v1437
    %v1473 = vpop.f32.mrb[0].mxu0
    %v1474 = vadd.f32 0.0, %v1473
    %v1475 = vpop.f32.mrb[0].mxu0
    %v1476 = vadd.f32 0.0, %v1475
    %v1477 = vpop.f32.mrb[0].mxu0
    %v1478 = vpop.f32.mrb[0].mxu0
    %1479 = vdwg.mxu0
    %v1482 = vrot.slane %v1474, 4
    %v1483 = vrot.slane %v1476, 4
    %v1486 = vadd.f32 %v1186, %v1482
    %v1487 = vadd.f32 %v1187, %v1483
    %v1488 = vtanh.pop %v1486
    %v1489 = vtanh.pop %v1487
    %v1490 = vxor.u32 %v1486, 2147483648
    %v1491 = vxor.u32 %v1487, 2147483648
    %v1492 = vmul.f32 %v1490, 1.442695
    %v1493 = vpow.pop %v1492
    %v1494 = vmul.f32 %v1491, 1.442695
    %v1495 = vpow.pop %v1494
    %v1496 = vadd.f32 %v1493, 1.0
    %v1497 = vadd.f32 %v1495, 1.0
    %v1498 = vrcp.pop %v1496
    %v1499 = vmul.f32 1.0, %v1498
    %v1500 = vrcp.pop %v1497
    %v1501 = vmul.f32 1.0, %v1500
    %v1502 = vsel %vm150, %v1488, %v1499
    %v1503 = vsel %vm151, %v1489, %v1501
    %v1505 = vrot.slane %v1426, 6
    %v1507 = vmul.f32 %v1502, %v1505
    %1509 = vrot.lane.b32.xlu0 %v1503, 64
    %v1510 = vpop.permute.xlu0 %1509
    %v1512 = vmul.f32 %v1502, %v1510
    %1514 = vrot.lane.b32.xlu0 %v1512, 64
    %v1515 = vpop.permute.xlu0 %1514
    %v1517 = vadd.f32 %v1507, %v1515
    %v1518 = vtanh.pop %v1517
    %1520 = vrot.lane.b32.xlu0 %v1518, 64
    %v1521 = vpop.permute.xlu0 %1520
    %v1523 = vmul.f32 %v1503, %v1521
    %v1524 = vpack.c.bf16 %v1523, %v1523
    %v1526 = vrot.slane %v1524, 2
    %v1528 = vsel %vm336, %v1526, 0
    %1530 = vmatprep.subr.bf16.mxu0 %v1246
    %1531 = vmatpush1.bf16.msra.mxu0 %v1245
    %1532 = vmatprep.subr.bf16.mxu0 %v1248
    %1533 = vmatpush1.bf16.msra.mxu0 %v1247
    %1534 = vmatprep.subr.bf16.mxu0 %v1250
    %1535 = vmatpush1.bf16.msra.mxu0 %v1249
    %1536 = vmatprep.subr.bf16.mxu0 %v1252
    %1537 = vmatpush1.bf16.msra.mxu0 %v1251
    %1538 = vmatprep.subr.bf16.mxu0 0
    %1539 = vmatpush1.bf16.msra.mxu0 0
    %1540 = vmatprep.subr.bf16.mxu0 0
    %1541 = vmatpush1.bf16.msra.mxu0 0
    %1542 = vmatprep.subr.bf16.mxu0 0
    %1543 = vmatpush1.bf16.msra.mxu0 0
    %1544 = vmatprep.subr.bf16.mxu0 0
    %1545 = vmatpush1.bf16.msra.mxu0 0
    %1546 = vmatprep.subr.bf16.mxu0 0
    %1547 = vmatpush1.bf16.msra.mxu0 0
    %1548 = vmatprep.subr.bf16.mxu0 0
    %1549 = vmatpush1.bf16.msra.mxu0 0
    %1550 = vmatprep.subr.bf16.mxu0 0
    %1551 = vmatpush1.bf16.msra.mxu0 0
    %1552 = vmatprep.subr.bf16.mxu0 0
    %1553 = vmatpush1.bf16.msra.mxu0 0
    %1554 = vmatprep.subr.bf16.mxu0 0
    %1555 = vmatpush1.bf16.msra.mxu0 0
    %1556 = vmatprep.subr.bf16.mxu0 0
    %1557 = vmatpush1.bf16.msra.mxu0 0
    %1558 = vmatprep.subr.bf16.mxu0 0
    %1559 = vmatpush1.bf16.msra.mxu0 0
    %1560 = vmatprep.subr.bf16.mxu0 0
    %1561 = vmatpush1.bf16.msra.mxu0 0
    %1562 = vmatprep.mubr.bf16.mxu0 0
    %1563 = vmatmul.mubr.bf16.gmra.mrb[0].mxu0 %v1528
    %v1564 = vpop.f32.mrb[0].mxu0
    %v1565 = vadd.f32 0.0, %v1564
    %v1566 = vpop.f32.mrb[0].mxu0
    %v1567 = vadd.f32 0.0, %v1566
    %v1568 = vpop.f32.mrb[0].mxu0
    %v1569 = vpop.f32.mrb[0].mxu0
    %1570 = vdwg.mxu0
    %v1573 = vrot.slane %v1565, 2
    %v1574 = vrot.slane %v1567, 2
    %v1577 = vadd.f32 %v1192, %v1573
    %v1578 = vadd.f32 %v1193, %v1574
    %v1579 = vtanh.pop %v1577
    %v1580 = vtanh.pop %v1578
    %v1581 = vxor.u32 %v1577, 2147483648
    %v1582 = vxor.u32 %v1578, 2147483648
    %v1583 = vmul.f32 %v1581, 1.442695
    %v1584 = vpow.pop %v1583
    %v1585 = vmul.f32 %v1582, 1.442695
    %v1586 = vpow.pop %v1585
    %v1587 = vadd.f32 %v1584, 1.0
    %v1588 = vadd.f32 %v1586, 1.0
    %v1589 = vrcp.pop %v1587
    %v1590 = vmul.f32 1.0, %v1589
    %v1591 = vrcp.pop %v1588
    %v1592 = vmul.f32 1.0, %v1591
    %v1593 = vsel %vm150, %v1579, %v1590
    %v1594 = vsel %vm151, %v1580, %v1592
    %v1596 = vrot.slane %v1517, 6
    %v1598 = vmul.f32 %v1593, %v1596
    %1600 = vrot.lane.b32.xlu0 %v1594, 64
    %v1601 = vpop.permute.xlu0 %1600
    %v1603 = vmul.f32 %v1593, %v1601
    %1605 = vrot.lane.b32.xlu0 %v1603, 64
    %v1606 = vpop.permute.xlu0 %1605
    %v1608 = vadd.f32 %v1598, %v1606
    %v1609 = vtanh.pop %v1608
    %1611 = vrot.lane.b32.xlu0 %v1609, 64
    %v1612 = vpop.permute.xlu0 %1611
    %v1614 = vmul.f32 %v1594, %v1612
    %v1615 = vpack.c.bf16 %v1614, %v1614
    %v1617 = vrot.slane %v1615, 3
    %v1619 = vsel %vm336, %v1617, 0
    %1621 = vmatprep.subr.bf16.mxu0 %v1246
    %1622 = vmatpush1.bf16.msra.mxu0 %v1245
    %1623 = vmatprep.subr.bf16.mxu0 %v1248
    %1624 = vmatpush1.bf16.msra.mxu0 %v1247
    %1625 = vmatprep.subr.bf16.mxu0 %v1250
    %1626 = vmatpush1.bf16.msra.mxu0 %v1249
    %1627 = vmatprep.subr.bf16.mxu0 %v1252
    %1628 = vmatpush1.bf16.msra.mxu0 %v1251
    %1629 = vmatprep.subr.bf16.mxu0 0
    %1630 = vmatpush1.bf16.msra.mxu0 0
    %1631 = vmatprep.subr.bf16.mxu0 0
    %1632 = vmatpush1.bf16.msra.mxu0 0
    %1633 = vmatprep.subr.bf16.mxu0 0
    %1634 = vmatpush1.bf16.msra.mxu0 0
    %1635 = vmatprep.subr.bf16.mxu0 0
    %1636 = vmatpush1.bf16.msra.mxu0 0
    %1637 = vmatprep.subr.bf16.mxu0 0
    %1638 = vmatpush1.bf16.msra.mxu0 0
    %1639 = vmatprep.subr.bf16.mxu0 0
    %1640 = vmatpush1.bf16.msra.mxu0 0
    %1641 = vmatprep.subr.bf16.mxu0 0
    %1642 = vmatpush1.bf16.msra.mxu0 0
    %1643 = vmatprep.subr.bf16.mxu0 0
    %1644 = vmatpush1.bf16.msra.mxu0 0
    %1645 = vmatprep.subr.bf16.mxu0 0
    %1646 = vmatpush1.bf16.msra.mxu0 0
    %1647 = vmatprep.subr.bf16.mxu0 0
    %1648 = vmatpush1.bf16.msra.mxu0 0
    %1649 = vmatprep.subr.bf16.mxu0 0
    %1650 = vmatpush1.bf16.msra.mxu0 0
    %1651 = vmatprep.subr.bf16.mxu0 0
    %1652 = vmatpush1.bf16.msra.mxu0 0
    %1653 = vmatprep.mubr.bf16.mxu0 0
    %1654 = vmatmul.mubr.bf16.gmra.mrb[0].mxu0 %v1619
    %v1655 = vpop.f32.mrb[0].mxu0
    %v1656 = vadd.f32 0.0, %v1655
    %v1657 = vpop.f32.mrb[0].mxu0
    %v1658 = vadd.f32 0.0, %v1657
    %v1659 = vpop.f32.mrb[0].mxu0
    %v1660 = vpop.f32.mrb[0].mxu0
    %1661 = vdwg.mxu0
    %v1662 = vadd.f32 %v1200, %v1656
    %v1663 = vadd.f32 %v1201, %v1658
    %v1664 = vtanh.pop %v1662
    %v1665 = vtanh.pop %v1663
    %v1666 = vxor.u32 %v1662, 2147483648
    %v1667 = vxor.u32 %v1663, 2147483648
    %v1668 = vmul.f32 %v1666, 1.442695
    %v1669 = vpow.pop %v1668
    %v1670 = vmul.f32 %v1667, 1.442695
    %v1671 = vpow.pop %v1670
    %v1672 = vadd.f32 %v1669, 1.0
    %v1673 = vadd.f32 %v1671, 1.0
    %v1674 = vrcp.pop %v1672
    %v1675 = vmul.f32 1.0, %v1674
    %v1676 = vrcp.pop %v1673
    %v1677 = vmul.f32 1.0, %v1676
    %v1678 = vsel %vm150, %v1664, %v1675
    %v1679 = vsel %vm151, %v1665, %v1677
    %v1681 = vrot.slane %v1608, 6
    %v1683 = vmul.f32 %v1678, %v1681
    %1685 = vrot.lane.b32.xlu0 %v1679, 64
    %v1686 = vpop.permute.xlu0 %1685
    %v1688 = vmul.f32 %v1678, %v1686
    %1690 = vrot.lane.b32.xlu0 %v1688, 64
    %v1691 = vpop.permute.xlu0 %1690
    %v1693 = vadd.f32 %v1683, %v1691
    %v1694 = vtanh.pop %v1693
    %1696 = vrot.lane.b32.xlu0 %v1694, 64
    %v1697 = vpop.permute.xlu0 %1696
    %v1699 = vmul.f32 %v1679, %v1697
    %v1700 = vpack.c.bf16 %v1699, %v1699
    %v1702 = vsel %vm336, %v1700, 0
    %1704 = vmatprep.subr.bf16.mxu0 %v1246
    %1705 = vmatpush1.bf16.msra.mxu0 %v1245
    %1706 = vmatprep.subr.bf16.mxu0 %v1248
    %1707 = vmatpush1.bf16.msra.mxu0 %v1247
    %1708 = vmatprep.subr.bf16.mxu0 %v1250
    %1709 = vmatpush1.bf16.msra.mxu0 %v1249
    %1710 = vmatprep.subr.bf16.mxu0 %v1252
    %1711 = vmatpush1.bf16.msra.mxu0 %v1251
    %1712 = vmatprep.subr.bf16.mxu0 0
    %1713 = vmatpush1.bf16.msra.mxu0 0
    %1714 = vmatprep.subr.bf16.mxu0 0
    %1715 = vmatpush1.bf16.msra.mxu0 0
    %1716 = vmatprep.subr.bf16.mxu0 0
    %1717 = vmatpush1.bf16.msra.mxu0 0
    %1718 = vmatprep.subr.bf16.mxu0 0
    %1719 = vmatpush1.bf16.msra.mxu0 0
    %1720 = vmatprep.subr.bf16.mxu0 0
    %1721 = vmatpush1.bf16.msra.mxu0 0
    %1722 = vmatprep.subr.bf16.mxu0 0
    %1723 = vmatpush1.bf16.msra.mxu0 0
    %1724 = vmatprep.subr.bf16.mxu0 0
    %1725 = vmatpush1.bf16.msra.mxu0 0
    %1726 = vmatprep.subr.bf16.mxu0 0
    %1727 = vmatpush1.bf16.msra.mxu0 0
    %1728 = vmatprep.subr.bf16.mxu0 0
    %1729 = vmatpush1.bf16.msra.mxu0 0
    %1730 = vmatprep.subr.bf16.mxu0 0
    %1731 = vmatpush1.bf16.msra.mxu0 0
    %1732 = vmatprep.subr.bf16.mxu0 0
    %1733 = vmatpush1.bf16.msra.mxu0 0
    %1734 = vmatprep.subr.bf16.mxu0 0
    %1735 = vmatpush1.bf16.msra.mxu0 0
    %1736 = vmatprep.mubr.bf16.mxu0 0
    %1737 = vmatmul.mubr.bf16.gmra.mrb[0].mxu0 %v1702
    %v1738 = vpop.f32.mrb[0].mxu0
    %v1739 = vadd.f32 0.0, %v1738
    %v1740 = vpop.f32.mrb[0].mxu0
    %v1741 = vadd.f32 0.0, %v1740
    %v1742 = vpop.f32.mrb[0].mxu0
    %v1743 = vpop.f32.mrb[0].mxu0
    %1744 = vdwg.mxu0
    %v1747 = vrot.slane %v1739, 6
    %v1748 = vrot.slane %v1741, 6
    %v1751 = vadd.f32 %v1206, %v1747
    %v1752 = vadd.f32 %v1207, %v1748
    %v1753 = vtanh.pop %v1751
    %v1754 = vtanh.pop %v1752
    %v1755 = vxor.u32 %v1751, 2147483648
    %v1756 = vxor.u32 %v1752, 2147483648
    %v1757 = vmul.f32 %v1755, 1.442695
    %v1758 = vpow.pop %v1757
    %v1759 = vmul.f32 %v1756, 1.442695
    %v1760 = vpow.pop %v1759
    %v1761 = vadd.f32 %v1758, 1.0
    %v1762 = vadd.f32 %v1760, 1.0
    %v1763 = vrcp.pop %v1761
    %v1764 = vmul.f32 1.0, %v1763
    %v1765 = vrcp.pop %v1762
    %v1766 = vmul.f32 1.0, %v1765
    %v1767 = vsel %vm150, %v1753, %v1764
    %v1768 = vsel %vm151, %v1754, %v1766
    %v1770 = vrot.slane %v1693, 6
    %v1772 = vmul.f32 %v1767, %v1770
    %1774 = vrot.lane.b32.xlu0 %v1768, 64
    %v1775 = vpop.permute.xlu0 %1774
    %v1777 = vmul.f32 %v1767, %v1775
    %1779 = vrot.lane.b32.xlu0 %v1777, 64
    %v1780 = vpop.permute.xlu0 %1779
    %v1782 = vadd.f32 %v1772, %v1780
    %v1783 = vtanh.pop %v1782
    %1785 = vrot.lane.b32.xlu0 %v1783, 64
    %v1786 = vpop.permute.xlu0 %1785
    %v1788 = vmul.f32 %v1768, %v1786
    %v1789 = vpack.c.bf16 %v1788, %v1788
    %v1791 = vrot.slane %v1789, 1
    %v1793 = vsel %vm336, %v1791, 0
    %1795 = vmatprep.subr.bf16.mxu0 %v1246
    %1796 = vmatpush1.bf16.msra.mxu0 %v1245
    %1797 = vmatprep.subr.bf16.mxu0 %v1248
    %1798 = vmatpush1.bf16.msra.mxu0 %v1247
    %1799 = vmatprep.subr.bf16.mxu0 %v1250
    %1800 = vmatpush1.bf16.msra.mxu0 %v1249
    %1801 = vmatprep.subr.bf16.mxu0 %v1252
    %1802 = vmatpush1.bf16.msra.mxu0 %v1251
    %1803 = vmatprep.subr.bf16.mxu0 0
    %1804 = vmatpush1.bf16.msra.mxu0 0
    %1805 = vmatprep.subr.bf16.mxu0 0
    %1806 = vmatpush1.bf16.msra.mxu0 0
    %1807 = vmatprep.subr.bf16.mxu0 0
    %1808 = vmatpush1.bf16.msra.mxu0 0
    %1809 = vmatprep.subr.bf16.mxu0 0
    %1810 = vmatpush1.bf16.msra.mxu0 0
    %1811 = vmatprep.subr.bf16.mxu0 0
    %1812 = vmatpush1.bf16.msra.mxu0 0
    %1813 = vmatprep.subr.bf16.mxu0 0
    %1814 = vmatpush1.bf16.msra.mxu0 0
    %1815 = vmatprep.subr.bf16.mxu0 0
    %1816 = vmatpush1.bf16.msra.mxu0 0
    %1817 = vmatprep.subr.bf16.mxu0 0
    %1818 = vmatpush1.bf16.msra.mxu0 0
    %1819 = vmatprep.subr.bf16.mxu0 0
    %1820 = vmatpush1.bf16.msra.mxu0 0
    %1821 = vmatprep.subr.bf16.mxu0 0
    %1822 = vmatpush1.bf16.msra.mxu0 0
    %1823 = vmatprep.subr.bf16.mxu0 0
    %1824 = vmatpush1.bf16.msra.mxu0 0
    %1825 = vmatprep.subr.bf16.mxu0 0
    %1826 = vmatpush1.bf16.msra.mxu0 0
    %1827 = vmatprep.mubr.bf16.mxu0 0
    %1828 = vmatmul.mubr.bf16.gmra.mrb[0].mxu0 %v1793
    %v1829 = vpop.f32.mrb[0].mxu0
    %v1830 = vadd.f32 0.0, %v1829
    %v1831 = vpop.f32.mrb[0].mxu0
    %v1832 = vadd.f32 0.0, %v1831
    %v1833 = vpop.f32.mrb[0].mxu0
    %v1834 = vpop.f32.mrb[0].mxu0
    %1835 = vdwg.mxu0
    %v1838 = vrot.slane %v1830, 4
    %v1839 = vrot.slane %v1832, 4
    %v1842 = vadd.f32 %v1200, %v1838
    %v1843 = vadd.f32 %v1201, %v1839
    %v1844 = vtanh.pop %v1842
    %v1845 = vtanh.pop %v1843
    %v1846 = vxor.u32 %v1842, 2147483648
    %v1847 = vxor.u32 %v1843, 2147483648
    %v1848 = vmul.f32 %v1846, 1.442695
    %v1849 = vpow.pop %v1848
    %v1850 = vmul.f32 %v1847, 1.442695
    %v1851 = vpow.pop %v1850
    %v1852 = vadd.f32 %v1849, 1.0
    %v1853 = vadd.f32 %v1851, 1.0
    %v1854 = vrcp.pop %v1852
    %v1855 = vmul.f32 1.0, %v1854
    %v1856 = vrcp.pop %v1853
    %v1857 = vmul.f32 1.0, %v1856
    %v1858 = vsel %vm150, %v1844, %v1855
    %v1859 = vsel %vm151, %v1845, %v1857
    %v1861 = vrot.slane %v1782, 6
    %v1863 = vmul.f32 %v1858, %v1861
    %1865 = vrot.lane.b32.xlu0 %v1859, 64
    %v1866 = vpop.permute.xlu0 %1865
    %v1868 = vmul.f32 %v1858, %v1866
    %1870 = vrot.lane.b32.xlu0 %v1868, 64
    %v1871 = vpop.permute.xlu0 %1870
    %v1873 = vadd.f32 %v1863, %v1871
    %v1874 = vtanh.pop %v1873
    %1876 = vrot.lane.b32.xlu0 %v1874, 64
    %v1877 = vpop.permute.xlu0 %1876
    %v1879 = vmul.f32 %v1859, %v1877
    %v1880 = vpack.c.bf16 %v1879, %v1879
    %v1882 = vrot.slane %v1880, 2
    %v1884 = vsel %vm336, %v1882, 0
    %1886 = vmatprep.subr.bf16.mxu0 %v1246
    %1887 = vmatpush1.bf16.msra.mxu0 %v1245
    %1888 = vmatprep.subr.bf16.mxu0 %v1248
    %1889 = vmatpush1.bf16.msra.mxu0 %v1247
    %1890 = vmatprep.subr.bf16.mxu0 %v1250
    %1891 = vmatpush1.bf16.msra.mxu0 %v1249
    %1892 = vmatprep.subr.bf16.mxu0 %v1252
    %1893 = vmatpush1.bf16.msra.mxu0 %v1251
    %1894 = vmatprep.subr.bf16.mxu0 0
    %1895 = vmatpush1.bf16.msra.mxu0 0
    %1896 = vmatprep.subr.bf16.mxu0 0
    %1897 = vmatpush1.bf16.msra.mxu0 0
    %1898 = vmatprep.subr.bf16.mxu0 0
    %1899 = vmatpush1.bf16.msra.mxu0 0
    %1900 = vmatprep.subr.bf16.mxu0 0
    %1901 = vmatpush1.bf16.msra.mxu0 0
    %1902 = vmatprep.subr.bf16.mxu0 0
    %1903 = vmatpush1.bf16.msra.mxu0 0
    %1904 = vmatprep.subr.bf16.mxu0 0
    %1905 = vmatpush1.bf16.msra.mxu0 0
    %1906 = vmatprep.subr.bf16.mxu0 0
    %1907 = vmatpush1.bf16.msra.mxu0 0
    %1908 = vmatprep.subr.bf16.mxu0 0
    %1909 = vmatpush1.bf16.msra.mxu0 0
    %1910 = vmatprep.subr.bf16.mxu0 0
    %1911 = vmatpush1.bf16.msra.mxu0 0
    %1912 = vmatprep.subr.bf16.mxu0 0
    %1913 = vmatpush1.bf16.msra.mxu0 0
    %1914 = vmatprep.subr.bf16.mxu0 0
    %1915 = vmatpush1.bf16.msra.mxu0 0
    %1916 = vmatprep.subr.bf16.mxu0 0
    %1917 = vmatpush1.bf16.msra.mxu0 0
    %1918 = vmatprep.mubr.bf16.mxu0 0
    %1919 = vmatmul.mubr.bf16.gmra.mrb[0].mxu0 %v1884
    %v1920 = vpop.f32.mrb[0].mxu0
    %v1921 = vadd.f32 0.0, %v1920
    %v1922 = vpop.f32.mrb[0].mxu0
    %v1923 = vadd.f32 0.0, %v1922
    %v1924 = vpop.f32.mrb[0].mxu0
    %v1925 = vpop.f32.mrb[0].mxu0
    %1926 = vdwg.mxu0
    %v1929 = vrot.slane %v1921, 2
    %v1930 = vrot.slane %v1923, 2
    %v1933 = vadd.f32 %v1206, %v1929
    %v1934 = vadd.f32 %v1207, %v1930
    %v1935 = vtanh.pop %v1933
    %v1936 = vtanh.pop %v1934
    %v1937 = vxor.u32 %v1933, 2147483648
    %v1938 = vxor.u32 %v1934, 2147483648
    %v1939 = vmul.f32 %v1937, 1.442695
    %v1940 = vpow.pop %v1939
    %v1941 = vmul.f32 %v1938, 1.442695
    %v1942 = vpow.pop %v1941
    %v1943 = vadd.f32 %v1940, 1.0
    %v1944 = vadd.f32 %v1942, 1.0
    %v1945 = vrcp.pop %v1943
    %v1946 = vmul.f32 1.0, %v1945
    %v1947 = vrcp.pop %v1944
    %v1948 = vmul.f32 1.0, %v1947
    %v1949 = vsel %vm150, %v1935, %v1946
    %v1950 = vsel %vm151, %v1936, %v1948
    %v1952 = vrot.slane %v1873, 6
    %v1954 = vmul.f32 %v1949, %v1952
    %1956 = vrot.lane.b32.xlu0 %v1950, 64
    %v1957 = vpop.permute.xlu0 %1956
    %v1959 = vmul.f32 %v1949, %v1957
    %1961 = vrot.lane.b32.xlu0 %v1959, 64
    %v1962 = vpop.permute.xlu0 %1961
    %v1964 = vadd.f32 %v1954, %v1962
    %v1965 = vtanh.pop %v1964
    %1967 = vrot.lane.b32.xlu0 %v1965, 64
    %v1968 = vpop.permute.xlu0 %1967
    %v1970 = vmul.f32 %v1950, %v1968
    %v1972 = vrot.slane %v1343, 2
    %v1974 = vsel %vm178, %v1970, %v1972
    %v1975 = vpack.c.bf16 %v1974, %v1974
    %v1976 = vld [vmem:[%s9] sm:$0xf]
    %v1977 = vld [vmem:[%s9 + $0x4] sm:$0xf]
    %v1978 = vld [vmem:[%s9 + $0x8] sm:$0xf]
    %v1979 = vld [vmem:[%s9 + $0xc] sm:$0xf]
    %v1980 = vld [vmem:[%s9 + $0x10] sm:$0xf]
    %v1981 = vld [vmem:[%s9 + $0x14] sm:$0xf]
    %v1982 = vld [vmem:[%s9 + $0x18] sm:$0xf]
    %v1983 = vld [vmem:[%s9 + $0x1c] sm:$0xf]
    %v1984 = vld [vmem:[%s10] sm:$0x1]
    %v1986 = vlaneseq
    %v1987 = vshrl.u32 %v1986, 7
    %v1988 = vsub.s32 0, %v1987
    %v1989 = vrot.slane %v1984, %v1988
    %v1992 = vrot.slane %v1975, 3
    %v2001 = vunpack.c.l.b16 %v1976
    %v2002 = vunpack.c.l.b16 %v1977
    %v2003 = vunpack.c.l.b16 %v1978
    %v2004 = vunpack.c.l.b16 %v1979
    %v2005 = vunpack.c.l.b16 %v1980
    %v2006 = vunpack.c.l.b16 %v1981
    %v2007 = vunpack.c.l.b16 %v1982
    %v2008 = vunpack.c.l.b16 %v1983
    %v2009 = vpack.c.b16 %v2002, %v2001
    %v2010 = vpack.c.b16 %v2004, %v2003
    %v2011 = vpack.c.b16 %v2006, %v2005
    %v2012 = vpack.c.b16 %v2008, %v2007
    %v2018 = vsel %vm336, %v1992, 0
    %2020 = vmatprep.subr.bf16.mxu0 0
    %2021 = vmatpush1.bf16.msra.mxu0 %v2009
    %2022 = vmatprep.subr.bf16.mxu0 0
    %2023 = vmatpush1.bf16.msra.mxu0 %v2010
    %2024 = vmatprep.subr.bf16.mxu0 0
    %2025 = vmatpush1.bf16.msra.mxu0 %v2011
    %2026 = vmatprep.subr.bf16.mxu0 0
    %2027 = vmatpush1.bf16.msra.mxu0 %v2012
    %2028 = vmatprep.subr.bf16.mxu0 0
    %2029 = vmatpush1.bf16.msra.mxu0 0
    %2030 = vmatprep.subr.bf16.mxu0 0
    %2031 = vmatpush1.bf16.msra.mxu0 0
    %2032 = vmatprep.subr.bf16.mxu0 0
    %2033 = vmatpush1.bf16.msra.mxu0 0
    %2034 = vmatprep.subr.bf16.mxu0 0
    %2035 = vmatpush1.bf16.msra.mxu0 0
    %2036 = vmatprep.subr.bf16.mxu0 0
    %2037 = vmatpush1.bf16.msra.mxu0 0
    %2038 = vmatprep.subr.bf16.mxu0 0
    %2039 = vmatpush1.bf16.msra.mxu0 0
    %2040 = vmatprep.subr.bf16.mxu0 0
    %2041 = vmatpush1.bf16.msra.mxu0 0
    %2042 = vmatprep.subr.bf16.mxu0 0
    %2043 = vmatpush1.bf16.msra.mxu0 0
    %2044 = vmatprep.subr.bf16.mxu0 0
    %2045 = vmatpush1.bf16.msra.mxu0 0
    %2046 = vmatprep.subr.bf16.mxu0 0
    %2047 = vmatpush1.bf16.msra.mxu0 0
    %2048 = vmatprep.subr.bf16.mxu0 0
    %2049 = vmatpush1.bf16.msra.mxu0 0
    %2050 = vmatprep.subr.bf16.mxu0 0
    %2051 = vmatpush1.bf16.msra.mxu0 0
    %2052 = vmatprep.mubr.bf16.mxu0 0
    %2053 = vmatmul.mubr.bf16.gmra.mrb[0].mxu0 %v2018
    %v2054 = vpop.f32.mrb[0].mxu0
    %v2055 = vadd.f32 %v1989, %v2054
    %v2056 = vpop.f32.mrb[0].mxu0
    %v2057 = vpop.f32.mrb[0].mxu0
    %v2058 = vpop.f32.mrb[0].mxu0
    %2059 = vdwg.mxu0
    %2060 = vst [vmem:[#allocation17] sm:$0x3] %v2055
    // Predicated region
    $region78: #{tpu_custom_call.1} parent=1 // pred_check
      _
    $region79: #{tpu_custom_call.1} parent=1 // pred_check_branch
      %2062 = sbr.rel (0) target = $region81
    $region80: #{tpu_custom_call.1} parent=1 // pred_region
      %s2064 = ssub.s32 32, 32
      %2065 = vsyncadd [#allocation5], %s2064
      %s2067 = sshll.u32 [#allocation17], 4
      %s2068 = int_to_ptr.vmem [resolvable:$true] %s2067
      %2070 = dma.vmem_to_hbm [thread:$0]  %s2068, 32, %s11, [#allocation5]
    $region81: #{tpu_custom_call.1} parent=1 // pred_fallthru
      _
    // Predicated region
    $region82: #{tpu_custom_call.1} parent=1 // pred_check
      _
    $region83: #{tpu_custom_call.1} parent=1 // pred_check_branch
      %2072 = sbr.rel (0) target = $region85
    $region84: #{tpu_custom_call.1} parent=1 // pred_region
      %2073 = dma.done [#allocation5], 32
    $region85: #{tpu_custom_call.1} parent=1 // pred_fallthru
      _
    %2074 = vsyncpa [#allocation4], 1
    %2075 = vsyncpa [#allocation7], 1
    %2076 = vsyncpa [#allocation10], 1
    %2077 = vsyncpa [#allocation13], 1
    %2078 = vsyncpa [#allocation16], 1
    %2079 = vsyncpa [#allocation5], 1

</llo_original>
